<compile_context>
chip_gen: v7x
topology: tpu7x:2x2x1
jax: 0.10.0
libtpu: 0.0.40
codegen_flags: <defaults>
</compile_context>

<pallas_src>
import jax
import jax.numpy as jnp
from jax.experimental import pallas as pl
from jax.experimental.pallas import tpu as pltpu

# Module hyper-parameters (small, consistent with the PyTorch module).
EMBED = 32
HEADS = 4
HEAD_DIM = EMBED // HEADS
SEQ = 8
BATCH = 2

NEG_FILL = -1e20   # masked_fill value
CLAMP = 1e6        # torch.clamp(energy, -1e6, 1e6)


def self_attention_kernel(qkv_ref, mask_ref, wqkv_ref, wo_ref, bo_ref, o_ref):
    """Full SelfAttention.forward for a (NB, L) slab of the batch.

    qkv_ref : (NB, L, 3E)  [queries | keys | values] concatenated on lanes
    mask_ref: (NB, 1, L)   1.0 = attend, 0.0 = masked key position
    wqkv_ref: (3E, 3E)     block-diagonal fused per-head q/k/v projection
    wo_ref  : (E, E)       fc_out weight (pre-transposed)
    bo_ref  : (1, E)       fc_out bias
    o_ref   : (NB, L, E)
    """
    nb, L, c3 = qkv_ref.shape
    E = c3 // 3
    D = E // HEADS
    R = nb * L

    # Fused projection: one lane-dense matmul replaces the 3 per-head linears.
    x = qkv_ref[...].reshape(R, c3)                               # (R, 3E)
    qkv = jnp.dot(x, wqkv_ref[...],
                  preferred_element_type=jnp.float32)             # (R, 3E)

    # Hoisted out of the head loop: key-position mask, computed once.
    is_masked = mask_ref[...] == 0.0                              # (NB, 1, L)
    scale = 1.0 / jnp.sqrt(jnp.float32(E))                        # embed_size**0.5

    def head(part, h):
        lo = part * E + h * D
        return qkv[:, lo:lo + D].reshape(nb, L, D)                # (NB, L, D)

    ctx_heads = []
    for h in range(HEADS):                                        # static unroll
        qh, kh, vh = head(0, h), head(1, h), head(2, h)
        # energy[n, q, k] -- single-batch-dim einsum (batched matmul)
        energy = jnp.einsum('nqd,nkd->nqk', qh, kh,
                            preferred_element_type=jnp.float32)   # (NB, L, L)
        energy = jnp.where(is_masked, NEG_FILL, energy)           # masked_fill
        energy = jnp.clip(energy, -CLAMP, CLAMP) * scale          # clamp, then /sqrt(E)
        m = jnp.max(energy, axis=-1, keepdims=True)               # stable softmax
        p = jnp.exp(energy - m)
        attn = p / jnp.sum(p, axis=-1, keepdims=True)
        ctx_heads.append(jnp.einsum('nqk,nkd->nqd', attn, vh,
                                    preferred_element_type=jnp.float32))
    # Heads live inside a single 128-lane tile -> cheap lane concat.
    ctx = jnp.concatenate(ctx_heads, axis=-1).reshape(R, E)       # (R, E)

    out = jnp.dot(ctx, wo_ref[...],
                  preferred_element_type=jnp.float32) + bo_ref[...]
    o_ref[...] = out.reshape(nb, L, E)


def _batch_grid(n):
    """Batch-parallel grid on multi-TensorCore chips (v7x), folded otherwise."""
    try:
        kind = jax.devices()[0].device_kind.lower()
    except Exception:
        kind = ""
    if "v7" in kind and n > 1:     # 2 TCs/chip: shard batch across cores
        return n
    return 1                       # v5e / v6e: single TC -> one grid step


def self_attention(queries, keys, values, mask, params):
    """queries/keys/values: (N, L, E) f32; mask: (N, 1, L) f32 (1 = keep).
    params = (w_qkv (3E,3E), wo_t (E,E), bo (1,E)).  Returns (N, L, E)."""
    w_qkv, wo_t, bo = params
    N, L, E = queries.shape
    assert keys.shape == (N, L, E) and values.shape == (N, L, E), (
        "fused kernel assumes query_len == key_len == value_len")
    qkv_in = jnp.concatenate([queries, keys, values], axis=-1)    # (N, L, 3E)

    G = _batch_grid(N)
    NB = N // G

    return pl.pallas_call(
        self_attention_kernel,
        out_shape=jax.ShapeDtypeStruct((N, L, E), jnp.float32),
        grid=(G,),
        in_specs=[
            pl.BlockSpec((NB, L, 3 * E), lambda b: (b, 0, 0)),    # qkv
            pl.BlockSpec((NB, 1, L), lambda b: (b, 0, 0)),        # mask
            pl.BlockSpec((3 * E, 3 * E), lambda b: (0, 0)),       # fused W_qkv
            pl.BlockSpec((E, E), lambda b: (0, 0)),               # fc_out W^T
            pl.BlockSpec((1, E), lambda b: (0, 0)),               # fc_out bias
        ],
        out_specs=pl.BlockSpec((NB, L, E), lambda b: (b, 0, 0)),
        compiler_params=pltpu.CompilerParams(
            dimension_semantics=("parallel",)),
    )(qkv_in, mask, w_qkv, wo_t, bo)


def pack_params(wq, wk, wv, wo, bo):
    """PyTorch parameters -> fused kernel parameters.
    wq/wk/wv: (D, D) per-head-dim Linear weights (no bias), shared over heads.
    wo: (E, E) fc_out weight; bo: (E,) fc_out bias.
    x.reshape(N,L,H,D) @ W.T per head  ==  x(N,L,E) @ kron(I_H, W.T)."""
    E = wo.shape[0]
    eye_h = jnp.eye(HEADS, dtype=jnp.float32)
    blocks = [jnp.kron(eye_h, w.T) for w in (wq, wk, wv)]         # each (E, E)
    w_qkv = jnp.zeros((3 * E, 3 * E), jnp.float32)
    for i, blk in enumerate(blocks):
        w_qkv = w_qkv.at[i * E:(i + 1) * E, i * E:(i + 1) * E].set(blk)
    return w_qkv, wo.T, bo.reshape(1, E)


def self_attention_ref(queries, keys, values, mask, wq, wk, wv, wo, bo):
    """Pure-JAX mirror of the PyTorch SelfAttention.forward (f32, HIGHEST prec)."""
    N, L, E = queries.shape
    D = E // HEADS
    hp = jax.lax.Precision.HIGHEST
    q = jnp.einsum('nlhd,ed->nlhe', queries.reshape(N, L, HEADS, D), wq, precision=hp)
    k = jnp.einsum('nlhd,ed->nlhe', keys.reshape(N, L, HEADS, D), wk, precision=hp)
    v = jnp.einsum('nlhd,ed->nlhe', values.reshape(N, L, HEADS, D), wv, precision=hp)
    energy = jnp.einsum('nqhd,nkhd->nhqk', q, k, precision=hp)
    energy = jnp.where(mask[:, :, None, :] == 0.0, NEG_FILL, energy)
    energy = jnp.clip(energy, -CLAMP, CLAMP)
    attn = jax.nn.softmax(energy / jnp.sqrt(jnp.float32(E)), axis=-1)
    ctx = jnp.einsum('nhqk,nkhd->nqhd', attn, v, precision=hp).reshape(N, L, E)
    return jnp.einsum('nle,oe->nlo', ctx, wo, precision=hp) + bo


if __name__ == "__main__":
    key = jax.random.PRNGKey(0)
    kq, kk, kv, k1, k2, k3, k4, k5 = jax.random.split(key, 8)

    queries = jax.random.normal(kq, (BATCH, SEQ, EMBED), jnp.float32)
    keys_in = jax.random.normal(kk, (BATCH, SEQ, EMBED), jnp.float32)
    values_in = jax.random.normal(kv, (BATCH, SEQ, EMBED), jnp.float32)

    # Key-padding mask (1 = attend, 0 = masked), broadcast over heads/queries.
    mask = jnp.ones((BATCH, 1, SEQ), jnp.float32)
    mask = mask.at[1, 0, SEQ - 2:].set(0.0)   # mask last 2 keys of batch elt 1

    scale = 0.05
    wq = jax.random.normal(k1, (HEAD_DIM, HEAD_DIM), jnp.float32) * scale
    wk = jax.random.normal(k2, (HEAD_DIM, HEAD_DIM), jnp.float32) * scale
    wv = jax.random.normal(k3, (HEAD_DIM, HEAD_DIM), jnp.float32) * scale
    wo = jax.random.normal(k4, (EMBED, EMBED), jnp.float32) * scale
    bo = jax.random.normal(k5, (EMBED,), jnp.float32) * scale

    params = pack_params(wq, wk, wv, wo, bo)
    out = self_attention(queries, keys_in, values_in, mask, params)
    jax.block_until_ready(out)
    assert out.shape == (BATCH, SEQ, EMBED)

    ref = self_attention_ref(queries, keys_in, values_in, mask, wq, wk, wv, wo, bo)
    err = float(jnp.max(jnp.abs(out - ref)))
    assert err < 2e-3, f"kernel/reference mismatch: max abs err = {err}"
    print("KERNEL_OK")
</pallas_src>

<mosaic_0001>
module attributes {stable_mosaic.version = 11 : i64} {
  func.func @self_attention_kernel(%arg0: i32, %arg1: memref<2x8x96xf32, #tpu.memory_space<vmem>>, %arg2: memref<2x1x8xf32, #tpu.memory_space<vmem>>, %arg3: memref<96x96xf32, #tpu.memory_space<vmem>>, %arg4: memref<32x32xf32, #tpu.memory_space<vmem>>, %arg5: memref<1x32xf32, #tpu.memory_space<vmem>>, %arg6: memref<2x8x32xf32, #tpu.memory_space<vmem>>) attributes {dimension_semantics = [#tpu.dimension_semantics<parallel>], iteration_bounds = array<i64: 1>, scalar_prefetch = 0 : i64, scratch_operands = 0 : i64, tpu.core_type = #tpu.core_type<tc>, window_params = [{transform_indices = @transform_0, window_bounds = array<i64: 2, 8, 96>}, {transform_indices = @transform_1, window_bounds = array<i64: 2, 1, 8>}, {pipeline_mode = #tpu.pipeline_mode<synchronous>, transform_indices = @transform_2, window_bounds = array<i64: 96, 96>}, {pipeline_mode = #tpu.pipeline_mode<synchronous>, transform_indices = @transform_3, window_bounds = array<i64: 32, 32>}, {pipeline_mode = #tpu.pipeline_mode<synchronous>, transform_indices = @transform_4, window_bounds = array<i64: 1, 32>}, {transform_indices = @transform_5, window_bounds = array<i64: 2, 8, 32>}]} {
    %c0 = arith.constant 0 : index
    %c0_0 = arith.constant 0 : index
    %c0_1 = arith.constant 0 : index
    %0 = vector.load %arg1[%c0, %c0_0, %c0_1] : memref<2x8x96xf32, #tpu.memory_space<vmem>>, vector<2x8x96xf32>
    %1 = vector.shape_cast %0 : vector<2x8x96xf32> to vector<16x96xf32>
    %c0_2 = arith.constant 0 : index
    %c0_3 = arith.constant 0 : index
    %2 = vector.load %arg3[%c0_2, %c0_3] : memref<96x96xf32, #tpu.memory_space<vmem>>, vector<96x96xf32>
    %cst = arith.constant dense<0.000000e+00> : vector<16x96xf32>
    %3 = tpu.matmul %1, %2, %cst {dimension_numbers = #tpu.dot_dimension_numbers<[1], [0], [0], [1], [0, 0, 1, 1], [], []>} : vector<16x96xf32>, vector<96x96xf32>, vector<16x96xf32> -> vector<16x96xf32>
    %c0_4 = arith.constant 0 : index
    %c0_5 = arith.constant 0 : index
    %c0_6 = arith.constant 0 : index
    %4 = vector.load %arg2[%c0_4, %c0_5, %c0_6] : memref<2x1x8xf32, #tpu.memory_space<vmem>>, vector<2x1x8xf32>
    %cst_7 = arith.constant 0.000000e+00 : f32
    %5 = vector.broadcast %cst_7 : f32 to vector<2x1x8xf32>
    %6 = arith.cmpf oeq, %4, %5 : vector<2x1x8xf32>
    %cst_8 = arith.constant 3.200000e+01 : f32
    %7 = math.sqrt %cst_8 : f32
    %cst_9 = arith.constant 1.000000e+00 : f32
    %8 = arith.divf %cst_9, %7 : f32
    %9 = vector.extract_strided_slice %3 {offsets = [0, 0], sizes = [16, 8], strides = [1, 1]} : vector<16x96xf32> to vector<16x8xf32>
    %10 = vector.shape_cast %9 : vector<16x8xf32> to vector<2x8x8xf32>
    %11 = vector.extract_strided_slice %3 {offsets = [0, 32], sizes = [16, 8], strides = [1, 1]} : vector<16x96xf32> to vector<16x8xf32>
    %12 = vector.shape_cast %11 : vector<16x8xf32> to vector<2x8x8xf32>
    %13 = vector.extract_strided_slice %3 {offsets = [0, 64], sizes = [16, 8], strides = [1, 1]} : vector<16x96xf32> to vector<16x8xf32>
    %14 = vector.shape_cast %13 : vector<16x8xf32> to vector<2x8x8xf32>
    "tpu.trace_start"() <{level = 10 : i32, message = "nqd,nkd->nqk"}> : () -> ()
    %cst_10 = arith.constant dense<0.000000e+00> : vector<2x8x8xf32>
    %15 = tpu.matmul %10, %12, %cst_10 {dimension_numbers = #tpu.dot_dimension_numbers<[2], [2], [1], [1], [0, 0, 0, 1, 1, 1], [0], [0]>} : vector<2x8x8xf32>, vector<2x8x8xf32>, vector<2x8x8xf32> -> vector<2x8x8xf32>
    %cst_11 = arith.constant -1.000000e+20 : f32
    "tpu.trace_stop"() : () -> ()
    %16 = vector.shape_cast %6 : vector<2x1x8xi1> to vector<2x1x8xi1>
    %17 = vector.broadcast %16 : vector<2x1x8xi1> to vector<2x8x8xi1>
    %18 = vector.broadcast %cst_11 : f32 to vector<2x8x8xf32>
    %19 = arith.select %17, %18, %15 : vector<2x8x8xi1>, vector<2x8x8xf32>
    %cst_12 = arith.constant -1.000000e+06 : f32
    %cst_13 = arith.constant 1.000000e+06 : f32
    %20 = vector.broadcast %cst_12 : f32 to vector<2x8x8xf32>
    %21 = arith.maximumf %20, %19 : vector<2x8x8xf32>
    %22 = vector.broadcast %cst_13 : f32 to vector<2x8x8xf32>
    %23 = arith.minimumf %22, %21 : vector<2x8x8xf32>
    %24 = vector.broadcast %8 : f32 to vector<2x8x8xf32>
    %25 = arith.mulf %23, %24 : vector<2x8x8xf32>
    %cst_14 = arith.constant dense<0xFF800000> : vector<2x8xf32>
    %26 = vector.multi_reduction <maximumf>, %25, %cst_14 [2] : vector<2x8x8xf32> to vector<2x8xf32>
    %27 = vector.shape_cast %26 : vector<2x8xf32> to vector<2x8x1xf32>
    %28 = vector.broadcast %27 : vector<2x8x1xf32> to vector<2x8x8xf32>
    %29 = arith.subf %25, %28 : vector<2x8x8xf32>
    %30 = math.exp %29 : vector<2x8x8xf32>
    %cst_15 = arith.constant dense<0.000000e+00> : vector<2x8xf32>
    %31 = vector.multi_reduction <add>, %30, %cst_15 [2] : vector<2x8x8xf32> to vector<2x8xf32>
    %32 = vector.shape_cast %31 : vector<2x8xf32> to vector<2x8x1xf32>
    %33 = vector.broadcast %32 : vector<2x8x1xf32> to vector<2x8x8xf32>
    %34 = arith.divf %30, %33 : vector<2x8x8xf32>
    "tpu.trace_start"() <{level = 10 : i32, message = "nqk,nkd->nqd"}> : () -> ()
    %cst_16 = arith.constant dense<0.000000e+00> : vector<2x8x8xf32>
    %35 = tpu.matmul %34, %14, %cst_16 {dimension_numbers = #tpu.dot_dimension_numbers<[2], [1], [1], [2], [0, 0, 0, 1, 1, 2], [0], [0]>} : vector<2x8x8xf32>, vector<2x8x8xf32>, vector<2x8x8xf32> -> vector<2x8x8xf32>
    "tpu.trace_stop"() : () -> ()
    %36 = vector.extract_strided_slice %3 {offsets = [0, 8], sizes = [16, 8], strides = [1, 1]} : vector<16x96xf32> to vector<16x8xf32>
    %37 = vector.shape_cast %36 : vector<16x8xf32> to vector<2x8x8xf32>
    %38 = vector.extract_strided_slice %3 {offsets = [0, 40], sizes = [16, 8], strides = [1, 1]} : vector<16x96xf32> to vector<16x8xf32>
    %39 = vector.shape_cast %38 : vector<16x8xf32> to vector<2x8x8xf32>
    %40 = vector.extract_strided_slice %3 {offsets = [0, 72], sizes = [16, 8], strides = [1, 1]} : vector<16x96xf32> to vector<16x8xf32>
    %41 = vector.shape_cast %40 : vector<16x8xf32> to vector<2x8x8xf32>
    "tpu.trace_start"() <{level = 10 : i32, message = "nqd,nkd->nqk"}> : () -> ()
    %cst_17 = arith.constant dense<0.000000e+00> : vector<2x8x8xf32>
    %42 = tpu.matmul %37, %39, %cst_17 {dimension_numbers = #tpu.dot_dimension_numbers<[2], [2], [1], [1], [0, 0, 0, 1, 1, 1], [0], [0]>} : vector<2x8x8xf32>, vector<2x8x8xf32>, vector<2x8x8xf32> -> vector<2x8x8xf32>
    %cst_18 = arith.constant -1.000000e+20 : f32
    "tpu.trace_stop"() : () -> ()
    %43 = vector.shape_cast %6 : vector<2x1x8xi1> to vector<2x1x8xi1>
    %44 = vector.broadcast %43 : vector<2x1x8xi1> to vector<2x8x8xi1>
    %45 = vector.broadcast %cst_18 : f32 to vector<2x8x8xf32>
    %46 = arith.select %44, %45, %42 : vector<2x8x8xi1>, vector<2x8x8xf32>
    %cst_19 = arith.constant -1.000000e+06 : f32
    %cst_20 = arith.constant 1.000000e+06 : f32
    %47 = vector.broadcast %cst_19 : f32 to vector<2x8x8xf32>
    %48 = arith.maximumf %47, %46 : vector<2x8x8xf32>
    %49 = vector.broadcast %cst_20 : f32 to vector<2x8x8xf32>
    %50 = arith.minimumf %49, %48 : vector<2x8x8xf32>
    %51 = vector.broadcast %8 : f32 to vector<2x8x8xf32>
    %52 = arith.mulf %50, %51 : vector<2x8x8xf32>
    %cst_21 = arith.constant dense<0xFF800000> : vector<2x8xf32>
    %53 = vector.multi_reduction <maximumf>, %52, %cst_21 [2] : vector<2x8x8xf32> to vector<2x8xf32>
    %54 = vector.shape_cast %53 : vector<2x8xf32> to vector<2x8x1xf32>
    %55 = vector.broadcast %54 : vector<2x8x1xf32> to vector<2x8x8xf32>
    %56 = arith.subf %52, %55 : vector<2x8x8xf32>
    %57 = math.exp %56 : vector<2x8x8xf32>
    %cst_22 = arith.constant dense<0.000000e+00> : vector<2x8xf32>
    %58 = vector.multi_reduction <add>, %57, %cst_22 [2] : vector<2x8x8xf32> to vector<2x8xf32>
    %59 = vector.shape_cast %58 : vector<2x8xf32> to vector<2x8x1xf32>
    %60 = vector.broadcast %59 : vector<2x8x1xf32> to vector<2x8x8xf32>
    %61 = arith.divf %57, %60 : vector<2x8x8xf32>
    "tpu.trace_start"() <{level = 10 : i32, message = "nqk,nkd->nqd"}> : () -> ()
    %cst_23 = arith.constant dense<0.000000e+00> : vector<2x8x8xf32>
    %62 = tpu.matmul %61, %41, %cst_23 {dimension_numbers = #tpu.dot_dimension_numbers<[2], [1], [1], [2], [0, 0, 0, 1, 1, 2], [0], [0]>} : vector<2x8x8xf32>, vector<2x8x8xf32>, vector<2x8x8xf32> -> vector<2x8x8xf32>
    "tpu.trace_stop"() : () -> ()
    %63 = vector.extract_strided_slice %3 {offsets = [0, 16], sizes = [16, 8], strides = [1, 1]} : vector<16x96xf32> to vector<16x8xf32>
    %64 = vector.shape_cast %63 : vector<16x8xf32> to vector<2x8x8xf32>
    %65 = vector.extract_strided_slice %3 {offsets = [0, 48], sizes = [16, 8], strides = [1, 1]} : vector<16x96xf32> to vector<16x8xf32>
    %66 = vector.shape_cast %65 : vector<16x8xf32> to vector<2x8x8xf32>
    %67 = vector.extract_strided_slice %3 {offsets = [0, 80], sizes = [16, 8], strides = [1, 1]} : vector<16x96xf32> to vector<16x8xf32>
    %68 = vector.shape_cast %67 : vector<16x8xf32> to vector<2x8x8xf32>
    "tpu.trace_start"() <{level = 10 : i32, message = "nqd,nkd->nqk"}> : () -> ()
    %cst_24 = arith.constant dense<0.000000e+00> : vector<2x8x8xf32>
    %69 = tpu.matmul %64, %66, %cst_24 {dimension_numbers = #tpu.dot_dimension_numbers<[2], [2], [1], [1], [0, 0, 0, 1, 1, 1], [0], [0]>} : vector<2x8x8xf32>, vector<2x8x8xf32>, vector<2x8x8xf32> -> vector<2x8x8xf32>
    %cst_25 = arith.constant -1.000000e+20 : f32
    "tpu.trace_stop"() : () -> ()
    %70 = vector.shape_cast %6 : vector<2x1x8xi1> to vector<2x1x8xi1>
    %71 = vector.broadcast %70 : vector<2x1x8xi1> to vector<2x8x8xi1>
    %72 = vector.broadcast %cst_25 : f32 to vector<2x8x8xf32>
    %73 = arith.select %71, %72, %69 : vector<2x8x8xi1>, vector<2x8x8xf32>
    %cst_26 = arith.constant -1.000000e+06 : f32
    %cst_27 = arith.constant 1.000000e+06 : f32
    %74 = vector.broadcast %cst_26 : f32 to vector<2x8x8xf32>
    %75 = arith.maximumf %74, %73 : vector<2x8x8xf32>
    %76 = vector.broadcast %cst_27 : f32 to vector<2x8x8xf32>
    %77 = arith.minimumf %76, %75 : vector<2x8x8xf32>
    %78 = vector.broadcast %8 : f32 to vector<2x8x8xf32>
    %79 = arith.mulf %77, %78 : vector<2x8x8xf32>
    %cst_28 = arith.constant dense<0xFF800000> : vector<2x8xf32>
    %80 = vector.multi_reduction <maximumf>, %79, %cst_28 [2] : vector<2x8x8xf32> to vector<2x8xf32>
    %81 = vector.shape_cast %80 : vector<2x8xf32> to vector<2x8x1xf32>
    %82 = vector.broadcast %81 : vector<2x8x1xf32> to vector<2x8x8xf32>
    %83 = arith.subf %79, %82 : vector<2x8x8xf32>
    %84 = math.exp %83 : vector<2x8x8xf32>
    %cst_29 = arith.constant dense<0.000000e+00> : vector<2x8xf32>
    %85 = vector.multi_reduction <add>, %84, %cst_29 [2] : vector<2x8x8xf32> to vector<2x8xf32>
    %86 = vector.shape_cast %85 : vector<2x8xf32> to vector<2x8x1xf32>
    %87 = vector.broadcast %86 : vector<2x8x1xf32> to vector<2x8x8xf32>
    %88 = arith.divf %84, %87 : vector<2x8x8xf32>
    "tpu.trace_start"() <{level = 10 : i32, message = "nqk,nkd->nqd"}> : () -> ()
    %cst_30 = arith.constant dense<0.000000e+00> : vector<2x8x8xf32>
    %89 = tpu.matmul %88, %68, %cst_30 {dimension_numbers = #tpu.dot_dimension_numbers<[2], [1], [1], [2], [0, 0, 0, 1, 1, 2], [0], [0]>} : vector<2x8x8xf32>, vector<2x8x8xf32>, vector<2x8x8xf32> -> vector<2x8x8xf32>
    "tpu.trace_stop"() : () -> ()
    %90 = vector.extract_strided_slice %3 {offsets = [0, 24], sizes = [16, 8], strides = [1, 1]} : vector<16x96xf32> to vector<16x8xf32>
    %91 = vector.shape_cast %90 : vector<16x8xf32> to vector<2x8x8xf32>
    %92 = vector.extract_strided_slice %3 {offsets = [0, 56], sizes = [16, 8], strides = [1, 1]} : vector<16x96xf32> to vector<16x8xf32>
    %93 = vector.shape_cast %92 : vector<16x8xf32> to vector<2x8x8xf32>
    %94 = vector.extract_strided_slice %3 {offsets = [0, 88], sizes = [16, 8], strides = [1, 1]} : vector<16x96xf32> to vector<16x8xf32>
    %95 = vector.shape_cast %94 : vector<16x8xf32> to vector<2x8x8xf32>
    "tpu.trace_start"() <{level = 10 : i32, message = "nqd,nkd->nqk"}> : () -> ()
    %cst_31 = arith.constant dense<0.000000e+00> : vector<2x8x8xf32>
    %96 = tpu.matmul %91, %93, %cst_31 {dimension_numbers = #tpu.dot_dimension_numbers<[2], [2], [1], [1], [0, 0, 0, 1, 1, 1], [0], [0]>} : vector<2x8x8xf32>, vector<2x8x8xf32>, vector<2x8x8xf32> -> vector<2x8x8xf32>
    %cst_32 = arith.constant -1.000000e+20 : f32
    "tpu.trace_stop"() : () -> ()
    %97 = vector.shape_cast %6 : vector<2x1x8xi1> to vector<2x1x8xi1>
    %98 = vector.broadcast %97 : vector<2x1x8xi1> to vector<2x8x8xi1>
    %99 = vector.broadcast %cst_32 : f32 to vector<2x8x8xf32>
    %100 = arith.select %98, %99, %96 : vector<2x8x8xi1>, vector<2x8x8xf32>
    %cst_33 = arith.constant -1.000000e+06 : f32
    %cst_34 = arith.constant 1.000000e+06 : f32
    %101 = vector.broadcast %cst_33 : f32 to vector<2x8x8xf32>
    %102 = arith.maximumf %101, %100 : vector<2x8x8xf32>
    %103 = vector.broadcast %cst_34 : f32 to vector<2x8x8xf32>
    %104 = arith.minimumf %103, %102 : vector<2x8x8xf32>
    %105 = vector.broadcast %8 : f32 to vector<2x8x8xf32>
    %106 = arith.mulf %104, %105 : vector<2x8x8xf32>
    %cst_35 = arith.constant dense<0xFF800000> : vector<2x8xf32>
    %107 = vector.multi_reduction <maximumf>, %106, %cst_35 [2] : vector<2x8x8xf32> to vector<2x8xf32>
    %108 = vector.shape_cast %107 : vector<2x8xf32> to vector<2x8x1xf32>
    %109 = vector.broadcast %108 : vector<2x8x1xf32> to vector<2x8x8xf32>
    %110 = arith.subf %106, %109 : vector<2x8x8xf32>
    %111 = math.exp %110 : vector<2x8x8xf32>
    %cst_36 = arith.constant dense<0.000000e+00> : vector<2x8xf32>
    %112 = vector.multi_reduction <add>, %111, %cst_36 [2] : vector<2x8x8xf32> to vector<2x8xf32>
    %113 = vector.shape_cast %112 : vector<2x8xf32> to vector<2x8x1xf32>
    %114 = vector.broadcast %113 : vector<2x8x1xf32> to vector<2x8x8xf32>
    %115 = arith.divf %111, %114 : vector<2x8x8xf32>
    "tpu.trace_start"() <{level = 10 : i32, message = "nqk,nkd->nqd"}> : () -> ()
    %cst_37 = arith.constant dense<0.000000e+00> : vector<2x8x8xf32>
    %116 = tpu.matmul %115, %95, %cst_37 {dimension_numbers = #tpu.dot_dimension_numbers<[2], [1], [1], [2], [0, 0, 0, 1, 1, 2], [0], [0]>} : vector<2x8x8xf32>, vector<2x8x8xf32>, vector<2x8x8xf32> -> vector<2x8x8xf32>
    "tpu.trace_stop"() : () -> ()
    %117 = tpu.concatenate %35, %62, %89, %116 in 2 : vector<2x8x8xf32>, vector<2x8x8xf32>, vector<2x8x8xf32>, vector<2x8x8xf32> -> vector<2x8x32xf32>
    %118 = vector.shape_cast %117 : vector<2x8x32xf32> to vector<16x32xf32>
    %c0_38 = arith.constant 0 : index
    %c0_39 = arith.constant 0 : index
    %119 = vector.load %arg4[%c0_38, %c0_39] : memref<32x32xf32, #tpu.memory_space<vmem>>, vector<32x32xf32>
    %cst_40 = arith.constant dense<0.000000e+00> : vector<16x32xf32>
    %120 = tpu.matmul %118, %119, %cst_40 {dimension_numbers = #tpu.dot_dimension_numbers<[1], [0], [0], [1], [0, 0, 1, 1], [], []>} : vector<16x32xf32>, vector<32x32xf32>, vector<16x32xf32> -> vector<16x32xf32>
    %c0_41 = arith.constant 0 : index
    %c0_42 = arith.constant 0 : index
    %121 = vector.load %arg5[%c0_41, %c0_42] : memref<1x32xf32, #tpu.memory_space<vmem>>, vector<1x32xf32>
    %122 = vector.broadcast %121 : vector<1x32xf32> to vector<16x32xf32>
    %123 = arith.addf %120, %122 : vector<16x32xf32>
    %124 = vector.shape_cast %123 : vector<16x32xf32> to vector<2x8x32xf32>
    %c0_43 = arith.constant 0 : index
    %c0_44 = arith.constant 0 : index
    %c0_45 = arith.constant 0 : index
    %125 = vector.load %arg6[%c0_43, %c0_44, %c0_45] : memref<2x8x32xf32, #tpu.memory_space<vmem>>, vector<2x8x32xf32>
    tpu.vector_store %arg6[%c0_43, %c0_44, %c0_45], %124 {strides = array<i32>} : memref<2x8x32xf32, #tpu.memory_space<vmem>>, vector<2x8x32xf32>,
    return
  }
  func.func @transform_0(%arg0: i32) -> (i32, i32, i32) {
    %c0_i32 = arith.constant 0 : i32
    %c0_i32_0 = arith.constant 0 : i32
    %c0_i32_1 = arith.constant 0 : i32
    return %arg0, %c0_i32, %c0_i32_0 : i32, i32, i32
  }
  func.func @transform_1(%arg0: i32) -> (i32, i32, i32) {
    %c0_i32 = arith.constant 0 : i32
    %c0_i32_0 = arith.constant 0 : i32
    %c0_i32_1 = arith.constant 0 : i32
    return %arg0, %c0_i32, %c0_i32_0 : i32, i32, i32
  }
  func.func @transform_2(%arg0: i32) -> (i32, i32) {
    %c0_i32 = arith.constant 0 : i32
    %c0_i32_0 = arith.constant 0 : i32
    %c0_i32_1 = arith.constant 0 : i32
    return %c0_i32, %c0_i32_0 : i32, i32
  }
  func.func @transform_3(%arg0: i32) -> (i32, i32) {
    %c0_i32 = arith.constant 0 : i32
    %c0_i32_0 = arith.constant 0 : i32
    %c0_i32_1 = arith.constant 0 : i32
    return %c0_i32, %c0_i32_0 : i32, i32
  }
  func.func @transform_4(%arg0: i32) -> (i32, i32) {
    %c0_i32 = arith.constant 0 : i32
    %c0_i32_0 = arith.constant 0 : i32
    %c0_i32_1 = arith.constant 0 : i32
    return %c0_i32, %c0_i32_0 : i32, i32
  }
  func.func @transform_5(%arg0: i32) -> (i32, i32, i32) {
    %c0_i32 = arith.constant 0 : i32
    %c0_i32_0 = arith.constant 0 : i32
    %c0_i32_1 = arith.constant 0 : i32
    return %arg0, %c0_i32, %c0_i32_0 : i32, i32, i32
  }
}

</mosaic_0001>

<llo_original>
// kernel: tpu_custom_call.1
$region0: #{tpu_custom_call.1}
  #allocation0 [shape = 'u32[]', space=smem, size = 0x4, offset = 0x4, fixed_abs, tag = 'smem constant byte address 0x4 - core index']
  #allocation1 [shape = 'u32[144,128]{1,0:T(1,128)}', space=vmem, size = 0x12000, scoped, tag = 'internal scratch']
  %s0 = inlined_call_operand.hbm [shape: f32[2,8,96], index: 0, kind: input, shape index: {}]
  %s1 = inlined_call_operand.vmem [shape: f32[2,1,8], index: 1, kind: input, shape index: {}]
  %s2 = inlined_call_operand.hbm [shape: f32[96,96], index: 2, kind: input, shape index: {}]
  %s3 = inlined_call_operand.hbm [shape: f32[32,32], index: 3, kind: input, shape index: {}]
  %s4 = inlined_call_operand.vmem [shape: f32[1,32], index: 4, kind: input, shape index: {}]
  %s5 = inlined_call_operand.hbm [shape: f32[2,8,32], index: 5, kind: output, shape index: {}]
  %s6 = sld [smem:[#allocation0]]
  $region42: #{tpu_custom_call.1} parent=0
    _
  %s8 = ssub.s32 1, %s6
  %s9 = scalar_select 0, %s8, %s6
  $region1: #{tpu_custom_call.1} parent=0
    #allocation2 [shape = 'u8[8192]{0}', space=vmem, size = 0x2000, scoped, tag = 'input window, operand 0, single buffered']
    #allocation3 [shape = 's32[1]{0}', space=sflag, size = 0x4, scoped, tag = 'scoped memory for tpu_custom_call.1']
    #allocation4 [shape = 's32[1]{0}', space=sflag, size = 0x4, scoped, tag = 'scoped memory for tpu_custom_call.1']
    #allocation5 [shape = 'u8[49152]{0}', space=vmem, size = 0xc000, scoped, tag = 'input window, operand 2, single buffered']
    #allocation6 [shape = 's32[1]{0}', space=sflag, size = 0x4, scoped, tag = 'scoped memory for tpu_custom_call.1']
    #allocation7 [shape = 'u8[16384]{0}', space=vmem, size = 0x4000, scoped, tag = 'input window, operand 3, single buffered']
    #allocation8 [shape = 'u8[8192]{0}', space=vmem, size = 0x2000, scoped, tag = 'output window, operand 0, single buffered']
    %10 = vsyncpa [#allocation3], 0
    %11 = vsyncpa [#allocation6], 0
    %12 = vsyncpa [#allocation4], 0
    // Predicated region
    $region2: #{tpu_custom_call.1} parent=1 // pred_check
      _
    $region3: #{tpu_custom_call.1} parent=1 // pred_check_branch
      %14 = sbr.rel (0) target = $region5
    $region4: #{tpu_custom_call.1} parent=1 // pred_region
      %s16 = ssub.s32 256, 256
      %17 = vsyncadd [#allocation3], %s16
      %s18 = sshll.u32 [#allocation2], 4
      %s19 = int_to_ptr.vmem [resolvable:$true] %s18
      %24 = dma.hbm_to_vmem [thread:$0]  %s0, 256, %s19, [#allocation3], 128, 128, 8
    $region5: #{tpu_custom_call.1} parent=1 // pred_fallthru
      _
    // Predicated region
    $region6: #{tpu_custom_call.1} parent=1 // pred_check
      _
    $region7: #{tpu_custom_call.1} parent=1 // pred_check_branch
      %26 = sbr.rel (0) target = $region9
    $region8: #{tpu_custom_call.1} parent=1 // pred_region
      _
    $region9: #{tpu_custom_call.1} parent=1 // pred_fallthru
      _
    // Predicated region
    $region10: #{tpu_custom_call.1} parent=1 // pred_check
      _
    $region11: #{tpu_custom_call.1} parent=1 // pred_check_branch
      %28 = sbr.rel (0) target = $region13
    $region12: #{tpu_custom_call.1} parent=1 // pred_region
      %s30 = ssub.s32 1536, 1536
      %31 = vsyncadd [#allocation6], %s30
      %s32 = sshll.u32 [#allocation5], 4
      %s33 = int_to_ptr.vmem [resolvable:$true] %s32
      %38 = dma.hbm_to_vmem [thread:$0]  %s2, 1536, %s33, [#allocation6], 128, 128, 8
    $region13: #{tpu_custom_call.1} parent=1 // pred_fallthru
      _
    // Predicated region
    $region14: #{tpu_custom_call.1} parent=1 // pred_check
      _
    $region15: #{tpu_custom_call.1} parent=1 // pred_check_branch
      %40 = sbr.rel (0) target = $region17
    $region16: #{tpu_custom_call.1} parent=1 // pred_region
      %s42 = ssub.s32 512, 512
      %43 = vsyncadd [#allocation6], %s42
      %s44 = sshll.u32 [#allocation7], 4
      %s45 = int_to_ptr.vmem [resolvable:$true] %s44
      %50 = dma.hbm_to_vmem [thread:$0]  %s3, 512, %s45, [#allocation6], 128, 128, 8
    $region17: #{tpu_custom_call.1} parent=1 // pred_fallthru
      _
    // Predicated region
    $region18: #{tpu_custom_call.1} parent=1 // pred_check
      _
    $region19: #{tpu_custom_call.1} parent=1 // pred_check_branch
      %52 = sbr.rel (0) target = $region21
    $region20: #{tpu_custom_call.1} parent=1 // pred_region
      _
    $region21: #{tpu_custom_call.1} parent=1 // pred_fallthru
      _
    // Predicated region
    $region22: #{tpu_custom_call.1} parent=1 // pred_check
      _
    $region23: #{tpu_custom_call.1} parent=1 // pred_check_branch
      %54 = sbr.rel (0) target = $region25
    $region24: #{tpu_custom_call.1} parent=1 // pred_region
      %55 = dma.done [#allocation3], 256
    $region25: #{tpu_custom_call.1} parent=1 // pred_fallthru
      _
    // Predicated region
    $region26: #{tpu_custom_call.1} parent=1 // pred_check
      _
    $region27: #{tpu_custom_call.1} parent=1 // pred_check_branch
      %57 = sbr.rel (0) target = $region29
    $region28: #{tpu_custom_call.1} parent=1 // pred_region
      %58 = dma.done [#allocation6], 1536
    $region29: #{tpu_custom_call.1} parent=1 // pred_fallthru
      _
    // Predicated region
    $region30: #{tpu_custom_call.1} parent=1 // pred_check
      _
    $region31: #{tpu_custom_call.1} parent=1 // pred_check_branch
      %60 = sbr.rel (0) target = $region33
    $region32: #{tpu_custom_call.1} parent=1 // pred_region
      %61 = dma.done [#allocation6], 512
    $region33: #{tpu_custom_call.1} parent=1 // pred_fallthru
      _
    %v62 = vld [vmem:[#allocation2] sm:$0xff]
    %v63 = vld [vmem:[#allocation2 + $0x8] sm:$0xff]
    %v64 = vld [vmem:[#allocation5] sm:$0xff]
    %v65 = vld [vmem:[#allocation5 + $0x8] sm:$0xff]
    %v66 = vld [vmem:[#allocation5 + $0x10] sm:$0xff]
    %v67 = vld [vmem:[#allocation5 + $0x18] sm:$0xff]
    %v68 = vld [vmem:[#allocation5 + $0x20] sm:$0xff]
    %v69 = vld [vmem:[#allocation5 + $0x28] sm:$0xff]
    %v70 = vld [vmem:[#allocation5 + $0x30] sm:$0xff]
    %v71 = vld [vmem:[#allocation5 + $0x38] sm:$0xff]
    %v72 = vld [vmem:[#allocation5 + $0x40] sm:$0xff]
    %v73 = vld [vmem:[#allocation5 + $0x48] sm:$0xff]
    %v74 = vld [vmem:[#allocation5 + $0x50] sm:$0xff]
    %v75 = vld [vmem:[#allocation5 + $0x58] sm:$0xff]
    %vm76 = vcmask 785408
    %v78 = vsel %vm76, %v62, 0
    %v81 = vsel %vm76, %v63, 0
    %83 = vmatprep.subr.mxu0 0.0
    %84 = vmatpush1.msra.mxu0 %v64
    %85 = vmatprep.subr.mxu0 0.0
    %86 = vmatpush1.msra.mxu0 %v65
    %87 = vmatprep.subr.mxu0 0.0
    %88 = vmatpush1.msra.mxu0 %v66
    %89 = vmatprep.subr.mxu0 0.0
    %90 = vmatpush1.msra.mxu0 %v67
    %91 = vmatprep.subr.mxu0 0.0
    %92 = vmatpush1.msra.mxu0 %v68
    %93 = vmatprep.subr.mxu0 0.0
    %94 = vmatpush1.msra.mxu0 %v69
    %95 = vmatprep.subr.mxu0 0.0
    %96 = vmatpush1.msra.mxu0 %v70
    %97 = vmatprep.subr.mxu0 0.0
    %98 = vmatpush1.msra.mxu0 %v71
    %99 = vmatprep.subr.mxu0 0.0
    %100 = vmatpush1.msra.mxu0 %v72
    %101 = vmatprep.subr.mxu0 0.0
    %102 = vmatpush1.msra.mxu0 %v73
    %103 = vmatprep.subr.mxu0 0.0
    %104 = vmatpush1.msra.mxu0 %v74
    %105 = vmatprep.subr.mxu0 0.0
    %106 = vmatpush1.msra.mxu0 %v75
    %107 = vmatprep.subr.mxu0 0.0
    %108 = vmatpush1.msra.mxu0 0.0
    %109 = vmatprep.subr.mxu0 0.0
    %110 = vmatpush1.msra.mxu0 0.0
    %111 = vmatprep.subr.mxu0 0.0
    %112 = vmatpush1.msra.mxu0 0.0
    %113 = vmatprep.subr.mxu0 0.0
    %114 = vmatpush1.msra.mxu0 0.0
    %115 = vmatprep.subr.mxu0 0.0
    %116 = vmatpush1.msra.mxu0 0.0
    %117 = vmatprep.subr.mxu0 0.0
    %118 = vmatpush1.msra.mxu0 0.0
    %119 = vmatprep.subr.mxu0 0.0
    %120 = vmatpush1.msra.mxu0 0.0
    %121 = vmatprep.subr.mxu0 0.0
    %122 = vmatpush1.msra.mxu0 0.0
    %123 = vmatprep.subr.mxu0 0.0
    %124 = vmatpush1.msra.mxu0 0.0
    %125 = vmatprep.subr.mxu0 0.0
    %126 = vmatpush1.msra.mxu0 0.0
    %127 = vmatprep.subr.mxu0 0.0
    %128 = vmatpush1.msra.mxu0 0.0
    %129 = vmatprep.subr.mxu0 0.0
    %130 = vmatpush1.msra.mxu0 0.0
    %131 = vmatprep.subr.mxu0 0.0
    %132 = vmatpush1.msra.mxu0 0.0
    %133 = vmatprep.subr.mxu0 0.0
    %134 = vmatpush1.msra.mxu0 0.0
    %135 = vmatprep.subr.mxu0 0.0
    %136 = vmatpush1.msra.mxu0 0.0
    %137 = vmatprep.subr.mxu0 0.0
    %138 = vmatpush1.msra.mxu0 0.0
    %139 = vmatprep.subr.mxu0 0.0
    %140 = vmatpush1.msra.mxu0 0.0
    %141 = vmatprep.subr.mxu0 0.0
    %142 = vmatpush1.msra.mxu0 0.0
    %143 = vmatprep.subr.mxu0 0.0
    %144 = vmatpush1.msra.mxu0 0.0
    %145 = vmatprep.subr.mxu0 0.0
    %146 = vmatpush1.msra.mxu0 0.0
    %147 = vmatprep.mubr.f32.mxu0 0.0
    %148 = vmatmul.mubr.f32.gmra.mrb[0].mxu0 %v78
    %v149 = vpop.f32.mrb[0].mxu0
    %v150 = vadd.f32 0.0, %v149
    %v151 = vpop.f32.mrb[0].mxu0
    %152 = vmatprep.mubr.f32.mxu0 0.0
    %153 = vmatmul.mubr.f32.gmra.mrb[0].mxu0 %v81
    %v154 = vpop.f32.mrb[0].mxu0
    %v155 = vadd.f32 0.0, %v154
    %v156 = vpop.f32.mrb[0].mxu0
    %157 = vdwg.mxu0
    %v158 = vld [vmem:[%s1] sm:$0x1]
    %v159 = vld [vmem:[%s1 + $0x1] sm:$0x1]
    %vm160 = vcmp.eq.f32.partialorder %v158, 0.0
    %vm161 = vcmp.eq.f32.partialorder %v159, 0.0
    %163 = vrot.lane.b32.xlu0 %v150, 96
    %v164 = vpop.permute.xlu0 %163
    %vm165 = vcmask 64512
    %v166 = vsel %vm165, %v150, 0
    %v168 = vsel %vm165, %v164, 0
    %170 = vmatprep.subr.mxu0 0.0
    %171 = vmatpush1.xpose.msra.mxu0 %v168
    %172 = vmatprep.subr.mxu0 0.0
    %173 = vmatpush1.xpose.msra.mxu0 0.0
    %174 = vmatprep.subr.mxu0 0.0
    %175 = vmatpush1.xpose.msra.mxu0 0.0
    %176 = vmatprep.subr.mxu0 0.0
    %177 = vmatpush1.xpose.msra.mxu0 0.0
    %178 = vmatprep.subr.mxu0 0.0
    %179 = vmatpush1.xpose.msra.mxu0 0.0
    %180 = vmatprep.subr.mxu0 0.0
    %181 = vmatpush1.xpose.msra.mxu0 0.0
    %182 = vmatprep.subr.mxu0 0.0
    %183 = vmatpush1.xpose.msra.mxu0 0.0
    %184 = vmatprep.subr.mxu0 0.0
    %185 = vmatpush1.xpose.msra.mxu0 0.0
    %186 = vmatprep.subr.mxu0 0.0
    %187 = vmatpush1.xpose.msra.mxu0 0.0
    %188 = vmatprep.subr.mxu0 0.0
    %189 = vmatpush1.xpose.msra.mxu0 0.0
    %190 = vmatprep.subr.mxu0 0.0
    %191 = vmatpush1.xpose.msra.mxu0 0.0
    %192 = vmatprep.subr.mxu0 0.0
    %193 = vmatpush1.xpose.msra.mxu0 0.0
    %194 = vmatprep.subr.mxu0 0.0
    %195 = vmatpush1.xpose.msra.mxu0 0.0
    %196 = vmatprep.subr.mxu0 0.0
    %197 = vmatpush1.xpose.msra.mxu0 0.0
    %198 = vmatprep.subr.mxu0 0.0
    %199 = vmatpush1.xpose.msra.mxu0 0.0
    %200 = vmatprep.subr.mxu0 0.0
    %201 = vmatpush1.xpose.msra.mxu0 0.0
    %202 = vmatprep.subr.mxu0 0.0
    %203 = vmatpush1.xpose.msra.mxu0 0.0
    %204 = vmatprep.subr.mxu0 0.0
    %205 = vmatpush1.xpose.msra.mxu0 0.0
    %206 = vmatprep.subr.mxu0 0.0
    %207 = vmatpush1.xpose.msra.mxu0 0.0
    %208 = vmatprep.subr.mxu0 0.0
    %209 = vmatpush1.xpose.msra.mxu0 0.0
    %210 = vmatprep.subr.mxu0 0.0
    %211 = vmatpush1.xpose.msra.mxu0 0.0
    %212 = vmatprep.subr.mxu0 0.0
    %213 = vmatpush1.xpose.msra.mxu0 0.0
    %214 = vmatprep.subr.mxu0 0.0
    %215 = vmatpush1.xpose.msra.mxu0 0.0
    %216 = vmatprep.subr.mxu0 0.0
    %217 = vmatpush1.xpose.msra.mxu0 0.0
    %218 = vmatprep.subr.mxu0 0.0
    %219 = vmatpush1.xpose.msra.mxu0 0.0
    %220 = vmatprep.subr.mxu0 0.0
    %221 = vmatpush1.xpose.msra.mxu0 0.0
    %222 = vmatprep.subr.mxu0 0.0
    %223 = vmatpush1.xpose.msra.mxu0 0.0
    %224 = vmatprep.subr.mxu0 0.0
    %225 = vmatpush1.xpose.msra.mxu0 0.0
    %226 = vmatprep.subr.mxu0 0.0
    %227 = vmatpush1.xpose.msra.mxu0 0.0
    %228 = vmatprep.subr.mxu0 0.0
    %229 = vmatpush1.xpose.msra.mxu0 0.0
    %230 = vmatprep.subr.mxu0 0.0
    %231 = vmatpush1.xpose.msra.mxu0 0.0
    %232 = vmatprep.subr.mxu0 0.0
    %233 = vmatpush1.xpose.msra.mxu0 0.0
    %234 = vmatprep.mubr.f32.mxu0 0.0
    %235 = vmatmul.mubr.f32.gmra.mrb[0].mxu0 %v166
    %v236 = vpop.f32.mrb[0].mxu0
    %v237 = vadd.f32 0.0, %v236
    %v238 = vpop.f32.mrb[0].mxu0
    %239 = vdwg.mxu0
    %241 = vrot.lane.b32.xlu0 %v155, 96
    %v242 = vpop.permute.xlu0 %241
    %v243 = vsel %vm165, %v155, 0
    %v245 = vsel %vm165, %v242, 0
    %247 = vmatprep.subr.mxu0 0.0
    %248 = vmatpush1.xpose.msra.mxu0 %v245
    %249 = vmatprep.subr.mxu0 0.0
    %250 = vmatpush1.xpose.msra.mxu0 0.0
    %251 = vmatprep.subr.mxu0 0.0
    %252 = vmatpush1.xpose.msra.mxu0 0.0
    %253 = vmatprep.subr.mxu0 0.0
    %254 = vmatpush1.xpose.msra.mxu0 0.0
    %255 = vmatprep.subr.mxu0 0.0
    %256 = vmatpush1.xpose.msra.mxu0 0.0
    %257 = vmatprep.subr.mxu0 0.0
    %258 = vmatpush1.xpose.msra.mxu0 0.0
    %259 = vmatprep.subr.mxu0 0.0
    %260 = vmatpush1.xpose.msra.mxu0 0.0
    %261 = vmatprep.subr.mxu0 0.0
    %262 = vmatpush1.xpose.msra.mxu0 0.0
    %263 = vmatprep.subr.mxu0 0.0
    %264 = vmatpush1.xpose.msra.mxu0 0.0
    %265 = vmatprep.subr.mxu0 0.0
    %266 = vmatpush1.xpose.msra.mxu0 0.0
    %267 = vmatprep.subr.mxu0 0.0
    %268 = vmatpush1.xpose.msra.mxu0 0.0
    %269 = vmatprep.subr.mxu0 0.0
    %270 = vmatpush1.xpose.msra.mxu0 0.0
    %271 = vmatprep.subr.mxu0 0.0
    %272 = vmatpush1.xpose.msra.mxu0 0.0
    %273 = vmatprep.subr.mxu0 0.0
    %274 = vmatpush1.xpose.msra.mxu0 0.0
    %275 = vmatprep.subr.mxu0 0.0
    %276 = vmatpush1.xpose.msra.mxu0 0.0
    %277 = vmatprep.subr.mxu0 0.0
    %278 = vmatpush1.xpose.msra.mxu0 0.0
    %279 = vmatprep.subr.mxu0 0.0
    %280 = vmatpush1.xpose.msra.mxu0 0.0
    %281 = vmatprep.subr.mxu0 0.0
    %282 = vmatpush1.xpose.msra.mxu0 0.0
    %283 = vmatprep.subr.mxu0 0.0
    %284 = vmatpush1.xpose.msra.mxu0 0.0
    %285 = vmatprep.subr.mxu0 0.0
    %286 = vmatpush1.xpose.msra.mxu0 0.0
    %287 = vmatprep.subr.mxu0 0.0
    %288 = vmatpush1.xpose.msra.mxu0 0.0
    %289 = vmatprep.subr.mxu0 0.0
    %290 = vmatpush1.xpose.msra.mxu0 0.0
    %291 = vmatprep.subr.mxu0 0.0
    %292 = vmatpush1.xpose.msra.mxu0 0.0
    %293 = vmatprep.subr.mxu0 0.0
    %294 = vmatpush1.xpose.msra.mxu0 0.0
    %295 = vmatprep.subr.mxu0 0.0
    %296 = vmatpush1.xpose.msra.mxu0 0.0
    %297 = vmatprep.subr.mxu0 0.0
    %298 = vmatpush1.xpose.msra.mxu0 0.0
    %299 = vmatprep.subr.mxu0 0.0
    %300 = vmatpush1.xpose.msra.mxu0 0.0
    %301 = vmatprep.subr.mxu0 0.0
    %302 = vmatpush1.xpose.msra.mxu0 0.0
    %303 = vmatprep.subr.mxu0 0.0
    %304 = vmatpush1.xpose.msra.mxu0 0.0
    %305 = vmatprep.subr.mxu0 0.0
    %306 = vmatpush1.xpose.msra.mxu0 0.0
    %307 = vmatprep.subr.mxu0 0.0
    %308 = vmatpush1.xpose.msra.mxu0 0.0
    %309 = vmatprep.subr.mxu0 0.0
    %310 = vmatpush1.xpose.msra.mxu0 0.0
    %311 = vmatprep.mubr.f32.mxu0 0.0
    %312 = vmatmul.mubr.f32.gmra.mrb[0].mxu0 %v243
    %v313 = vpop.f32.mrb[0].mxu0
    %v314 = vadd.f32 0.0, %v313
    %v315 = vpop.f32.mrb[0].mxu0
    %316 = vdwg.mxu0
    %v317 = vsel %vm160, 1, 0
    %v318 = vsel %vm161, 1, 0
    %v319 = vlaneseq
    %v320 = vshrl.u32 %v319, 7
    %v321 = vsub.s32 0, %v320
    %v322 = vrot.slane %v317, %v321
    %v323 = vlaneseq
    %v324 = vshrl.u32 %v323, 7
    %v325 = vsub.s32 0, %v324
    %v326 = vrot.slane %v318, %v325
    %vm327 = vcmp.eq.s32.totalorder %v322, 1
    %vm328 = vcmp.eq.s32.totalorder %v326, 1
    %v329 = vsel %vm327, -1e+20, %v237
    %v330 = vsel %vm328, -1e+20, %v314
    %v331 = vmax.f32 %v329, -1000000.0
    %v332 = vmax.f32 %v330, -1000000.0
    %v333 = vmin.f32 %v331, 1000000.0
    %v334 = vmin.f32 %v332, 1000000.0
    %v335 = vmul.f32 %v333, 0.17677669
    %v336 = vmul.f32 %v334, 0.17677669
    %v337 = vsel %vm165, %v335, -inf
    %338 = vmax.xlane.f32.xlu0 %v337
    %v339 = vpop.xlane.xlu0 %338
    %v340 = vsel %vm165, %v336, -inf
    %341 = vmax.xlane.f32.xlu0 %v340
    %v342 = vpop.xlane.xlu0 %341
    %v343 = vsub.f32 %v335, %v339
    %v344 = vsub.f32 %v336, %v342
    %v345 = vmul.f32 %v343, 1.442695
    %v346 = vpow.pop %v345
    %v347 = vmul.f32 %v344, 1.442695
    %v348 = vpow.pop %v347
    %v349 = vsel %vm165, %v346, 0.0
    %350 = vadd.xlane.f32.xlu0 %v349
    %v351 = vpop.xlane.xlu0 %350
    %v352 = vsel %vm165, %v348, 0.0
    %353 = vadd.xlane.f32.xlu0 %v352
    %v354 = vpop.xlane.xlu0 %353
    %v355 = vrcp.pop %v351
    %v356 = vmul.f32 %v346, %v355
    %v357 = vrcp.pop %v354
    %v358 = vmul.f32 %v348, %v357
    %359 = vrot.lane.b32.xlu0 %v150, 64
    %v360 = vpop.permute.xlu0 %359
    %v363 = vsel %vm165, %v356, 0
    %365 = vmatprep.subr.mxu0 0.0
    %366 = vmatpush1.msra.mxu0 %v360
    %367 = vmatprep.subr.mxu0 0.0
    %368 = vmatpush1.msra.mxu0 0.0
    %369 = vmatprep.subr.mxu0 0.0
    %370 = vmatpush1.msra.mxu0 0.0
    %371 = vmatprep.subr.mxu0 0.0
    %372 = vmatpush1.msra.mxu0 0.0
    %373 = vmatprep.subr.mxu0 0.0
    %374 = vmatpush1.msra.mxu0 0.0
    %375 = vmatprep.subr.mxu0 0.0
    %376 = vmatpush1.msra.mxu0 0.0
    %377 = vmatprep.subr.mxu0 0.0
    %378 = vmatpush1.msra.mxu0 0.0
    %379 = vmatprep.subr.mxu0 0.0
    %380 = vmatpush1.msra.mxu0 0.0
    %381 = vmatprep.subr.mxu0 0.0
    %382 = vmatpush1.msra.mxu0 0.0
    %383 = vmatprep.subr.mxu0 0.0
    %384 = vmatpush1.msra.mxu0 0.0
    %385 = vmatprep.subr.mxu0 0.0
    %386 = vmatpush1.msra.mxu0 0.0
    %387 = vmatprep.subr.mxu0 0.0
    %388 = vmatpush1.msra.mxu0 0.0
    %389 = vmatprep.subr.mxu0 0.0
    %390 = vmatpush1.msra.mxu0 0.0
    %391 = vmatprep.subr.mxu0 0.0
    %392 = vmatpush1.msra.mxu0 0.0
    %393 = vmatprep.subr.mxu0 0.0
    %394 = vmatpush1.msra.mxu0 0.0
    %395 = vmatprep.subr.mxu0 0.0
    %396 = vmatpush1.msra.mxu0 0.0
    %397 = vmatprep.subr.mxu0 0.0
    %398 = vmatpush1.msra.mxu0 0.0
    %399 = vmatprep.subr.mxu0 0.0
    %400 = vmatpush1.msra.mxu0 0.0
    %401 = vmatprep.subr.mxu0 0.0
    %402 = vmatpush1.msra.mxu0 0.0
    %403 = vmatprep.subr.mxu0 0.0
    %404 = vmatpush1.msra.mxu0 0.0
    %405 = vmatprep.subr.mxu0 0.0
    %406 = vmatpush1.msra.mxu0 0.0
    %407 = vmatprep.subr.mxu0 0.0
    %408 = vmatpush1.msra.mxu0 0.0
    %409 = vmatprep.subr.mxu0 0.0
    %410 = vmatpush1.msra.mxu0 0.0
    %411 = vmatprep.subr.mxu0 0.0
    %412 = vmatpush1.msra.mxu0 0.0
    %413 = vmatprep.subr.mxu0 0.0
    %414 = vmatpush1.msra.mxu0 0.0
    %415 = vmatprep.subr.mxu0 0.0
    %416 = vmatpush1.msra.mxu0 0.0
    %417 = vmatprep.subr.mxu0 0.0
    %418 = vmatpush1.msra.mxu0 0.0
    %419 = vmatprep.subr.mxu0 0.0
    %420 = vmatpush1.msra.mxu0 0.0
    %421 = vmatprep.subr.mxu0 0.0
    %422 = vmatpush1.msra.mxu0 0.0
    %423 = vmatprep.subr.mxu0 0.0
    %424 = vmatpush1.msra.mxu0 0.0
    %425 = vmatprep.subr.mxu0 0.0
    %426 = vmatpush1.msra.mxu0 0.0
    %427 = vmatprep.subr.mxu0 0.0
    %428 = vmatpush1.msra.mxu0 0.0
    %429 = vmatprep.mubr.f32.mxu0 0.0
    %430 = vmatmul.mubr.f32.gmra.mrb[0].mxu0 %v363
    %v431 = vpop.f32.mrb[0].mxu0
    %v432 = vadd.f32 0.0, %v431
    %v433 = vpop.f32.mrb[0].mxu0
    %434 = vdwg.mxu0
    %435 = vrot.lane.b32.xlu0 %v155, 64
    %v436 = vpop.permute.xlu0 %435
    %v439 = vsel %vm165, %v358, 0
    %441 = vmatprep.subr.mxu0 0.0
    %442 = vmatpush1.msra.mxu0 %v436
    %443 = vmatprep.subr.mxu0 0.0
    %444 = vmatpush1.msra.mxu0 0.0
    %445 = vmatprep.subr.mxu0 0.0
    %446 = vmatpush1.msra.mxu0 0.0
    %447 = vmatprep.subr.mxu0 0.0
    %448 = vmatpush1.msra.mxu0 0.0
    %449 = vmatprep.subr.mxu0 0.0
    %450 = vmatpush1.msra.mxu0 0.0
    %451 = vmatprep.subr.mxu0 0.0
    %452 = vmatpush1.msra.mxu0 0.0
    %453 = vmatprep.subr.mxu0 0.0
    %454 = vmatpush1.msra.mxu0 0.0
    %455 = vmatprep.subr.mxu0 0.0
    %456 = vmatpush1.msra.mxu0 0.0
    %457 = vmatprep.subr.mxu0 0.0
    %458 = vmatpush1.msra.mxu0 0.0
    %459 = vmatprep.subr.mxu0 0.0
    %460 = vmatpush1.msra.mxu0 0.0
    %461 = vmatprep.subr.mxu0 0.0
    %462 = vmatpush1.msra.mxu0 0.0
    %463 = vmatprep.subr.mxu0 0.0
    %464 = vmatpush1.msra.mxu0 0.0
    %465 = vmatprep.subr.mxu0 0.0
    %466 = vmatpush1.msra.mxu0 0.0
    %467 = vmatprep.subr.mxu0 0.0
    %468 = vmatpush1.msra.mxu0 0.0
    %469 = vmatprep.subr.mxu0 0.0
    %470 = vmatpush1.msra.mxu0 0.0
    %471 = vmatprep.subr.mxu0 0.0
    %472 = vmatpush1.msra.mxu0 0.0
    %473 = vmatprep.subr.mxu0 0.0
    %474 = vmatpush1.msra.mxu0 0.0
    %475 = vmatprep.subr.mxu0 0.0
    %476 = vmatpush1.msra.mxu0 0.0
    %477 = vmatprep.subr.mxu0 0.0
    %478 = vmatpush1.msra.mxu0 0.0
    %479 = vmatprep.subr.mxu0 0.0
    %480 = vmatpush1.msra.mxu0 0.0
    %481 = vmatprep.subr.mxu0 0.0
    %482 = vmatpush1.msra.mxu0 0.0
    %483 = vmatprep.subr.mxu0 0.0
    %484 = vmatpush1.msra.mxu0 0.0
    %485 = vmatprep.subr.mxu0 0.0
    %486 = vmatpush1.msra.mxu0 0.0
    %487 = vmatprep.subr.mxu0 0.0
    %488 = vmatpush1.msra.mxu0 0.0
    %489 = vmatprep.subr.mxu0 0.0
    %490 = vmatpush1.msra.mxu0 0.0
    %491 = vmatprep.subr.mxu0 0.0
    %492 = vmatpush1.msra.mxu0 0.0
    %493 = vmatprep.subr.mxu0 0.0
    %494 = vmatpush1.msra.mxu0 0.0
    %495 = vmatprep.subr.mxu0 0.0
    %496 = vmatpush1.msra.mxu0 0.0
    %497 = vmatprep.subr.mxu0 0.0
    %498 = vmatpush1.msra.mxu0 0.0
    %499 = vmatprep.subr.mxu0 0.0
    %500 = vmatpush1.msra.mxu0 0.0
    %501 = vmatprep.subr.mxu0 0.0
    %502 = vmatpush1.msra.mxu0 0.0
    %503 = vmatprep.subr.mxu0 0.0
    %504 = vmatpush1.msra.mxu0 0.0
    %505 = vmatprep.mubr.f32.mxu0 0.0
    %506 = vmatmul.mubr.f32.gmra.mrb[0].mxu0 %v439
    %v507 = vpop.f32.mrb[0].mxu0
    %v508 = vadd.f32 0.0, %v507
    %v509 = vpop.f32.mrb[0].mxu0
    %510 = vdwg.mxu0
    %511 = vrot.lane.b32.xlu0 %v150, 120
    %v512 = vpop.permute.xlu0 %511
    %513 = vrot.lane.b32.xlu0 %v150, 88
    %v514 = vpop.permute.xlu0 %513
    %v515 = vsel %vm165, %v512, 0
    %v517 = vsel %vm165, %v514, 0
    %519 = vmatprep.subr.mxu0 0.0
    %520 = vmatpush1.xpose.msra.mxu0 %v517
    %521 = vmatprep.subr.mxu0 0.0
    %522 = vmatpush1.xpose.msra.mxu0 0.0
    %523 = vmatprep.subr.mxu0 0.0
    %524 = vmatpush1.xpose.msra.mxu0 0.0
    %525 = vmatprep.subr.mxu0 0.0
    %526 = vmatpush1.xpose.msra.mxu0 0.0
    %527 = vmatprep.subr.mxu0 0.0
    %528 = vmatpush1.xpose.msra.mxu0 0.0
    %529 = vmatprep.subr.mxu0 0.0
    %530 = vmatpush1.xpose.msra.mxu0 0.0
    %531 = vmatprep.subr.mxu0 0.0
    %532 = vmatpush1.xpose.msra.mxu0 0.0
    %533 = vmatprep.subr.mxu0 0.0
    %534 = vmatpush1.xpose.msra.mxu0 0.0
    %535 = vmatprep.subr.mxu0 0.0
    %536 = vmatpush1.xpose.msra.mxu0 0.0
    %537 = vmatprep.subr.mxu0 0.0
    %538 = vmatpush1.xpose.msra.mxu0 0.0
    %539 = vmatprep.subr.mxu0 0.0
    %540 = vmatpush1.xpose.msra.mxu0 0.0
    %541 = vmatprep.subr.mxu0 0.0
    %542 = vmatpush1.xpose.msra.mxu0 0.0
    %543 = vmatprep.subr.mxu0 0.0
    %544 = vmatpush1.xpose.msra.mxu0 0.0
    %545 = vmatprep.subr.mxu0 0.0
    %546 = vmatpush1.xpose.msra.mxu0 0.0
    %547 = vmatprep.subr.mxu0 0.0
    %548 = vmatpush1.xpose.msra.mxu0 0.0
    %549 = vmatprep.subr.mxu0 0.0
    %550 = vmatpush1.xpose.msra.mxu0 0.0
    %551 = vmatprep.subr.mxu0 0.0
    %552 = vmatpush1.xpose.msra.mxu0 0.0
    %553 = vmatprep.subr.mxu0 0.0
    %554 = vmatpush1.xpose.msra.mxu0 0.0
    %555 = vmatprep.subr.mxu0 0.0
    %556 = vmatpush1.xpose.msra.mxu0 0.0
    %557 = vmatprep.subr.mxu0 0.0
    %558 = vmatpush1.xpose.msra.mxu0 0.0
    %559 = vmatprep.subr.mxu0 0.0
    %560 = vmatpush1.xpose.msra.mxu0 0.0
    %561 = vmatprep.subr.mxu0 0.0
    %562 = vmatpush1.xpose.msra.mxu0 0.0
    %563 = vmatprep.subr.mxu0 0.0
    %564 = vmatpush1.xpose.msra.mxu0 0.0
    %565 = vmatprep.subr.mxu0 0.0
    %566 = vmatpush1.xpose.msra.mxu0 0.0
    %567 = vmatprep.subr.mxu0 0.0
    %568 = vmatpush1.xpose.msra.mxu0 0.0
    %569 = vmatprep.subr.mxu0 0.0
    %570 = vmatpush1.xpose.msra.mxu0 0.0
    %571 = vmatprep.subr.mxu0 0.0
    %572 = vmatpush1.xpose.msra.mxu0 0.0
    %573 = vmatprep.subr.mxu0 0.0
    %574 = vmatpush1.xpose.msra.mxu0 0.0
    %575 = vmatprep.subr.mxu0 0.0
    %576 = vmatpush1.xpose.msra.mxu0 0.0
    %577 = vmatprep.subr.mxu0 0.0
    %578 = vmatpush1.xpose.msra.mxu0 0.0
    %579 = vmatprep.subr.mxu0 0.0
    %580 = vmatpush1.xpose.msra.mxu0 0.0
    %581 = vmatprep.subr.mxu0 0.0
    %582 = vmatpush1.xpose.msra.mxu0 0.0
    %583 = vmatprep.mubr.f32.mxu0 0.0
    %584 = vmatmul.mubr.f32.gmra.mrb[0].mxu0 %v515
    %v585 = vpop.f32.mrb[0].mxu0
    %v586 = vadd.f32 0.0, %v585
    %v587 = vpop.f32.mrb[0].mxu0
    %588 = vdwg.mxu0
    %589 = vrot.lane.b32.xlu0 %v155, 120
    %v590 = vpop.permute.xlu0 %589
    %591 = vrot.lane.b32.xlu0 %v155, 88
    %v592 = vpop.permute.xlu0 %591
    %v593 = vsel %vm165, %v590, 0
    %v595 = vsel %vm165, %v592, 0
    %597 = vmatprep.subr.mxu0 0.0
    %598 = vmatpush1.xpose.msra.mxu0 %v595
    %599 = vmatprep.subr.mxu0 0.0
    %600 = vmatpush1.xpose.msra.mxu0 0.0
    %601 = vmatprep.subr.mxu0 0.0
    %602 = vmatpush1.xpose.msra.mxu0 0.0
    %603 = vmatprep.subr.mxu0 0.0
    %604 = vmatpush1.xpose.msra.mxu0 0.0
    %605 = vmatprep.subr.mxu0 0.0
    %606 = vmatpush1.xpose.msra.mxu0 0.0
    %607 = vmatprep.subr.mxu0 0.0
    %608 = vmatpush1.xpose.msra.mxu0 0.0
    %609 = vmatprep.subr.mxu0 0.0
    %610 = vmatpush1.xpose.msra.mxu0 0.0
    %611 = vmatprep.subr.mxu0 0.0
    %612 = vmatpush1.xpose.msra.mxu0 0.0
    %613 = vmatprep.subr.mxu0 0.0
    %614 = vmatpush1.xpose.msra.mxu0 0.0
    %615 = vmatprep.subr.mxu0 0.0
    %616 = vmatpush1.xpose.msra.mxu0 0.0
    %617 = vmatprep.subr.mxu0 0.0
    %618 = vmatpush1.xpose.msra.mxu0 0.0
    %619 = vmatprep.subr.mxu0 0.0
    %620 = vmatpush1.xpose.msra.mxu0 0.0
    %621 = vmatprep.subr.mxu0 0.0
    %622 = vmatpush1.xpose.msra.mxu0 0.0
    %623 = vmatprep.subr.mxu0 0.0
    %624 = vmatpush1.xpose.msra.mxu0 0.0
    %625 = vmatprep.subr.mxu0 0.0
    %626 = vmatpush1.xpose.msra.mxu0 0.0
    %627 = vmatprep.subr.mxu0 0.0
    %628 = vmatpush1.xpose.msra.mxu0 0.0
    %629 = vmatprep.subr.mxu0 0.0
    %630 = vmatpush1.xpose.msra.mxu0 0.0
    %631 = vmatprep.subr.mxu0 0.0
    %632 = vmatpush1.xpose.msra.mxu0 0.0
    %633 = vmatprep.subr.mxu0 0.0
    %634 = vmatpush1.xpose.msra.mxu0 0.0
    %635 = vmatprep.subr.mxu0 0.0
    %636 = vmatpush1.xpose.msra.mxu0 0.0
    %637 = vmatprep.subr.mxu0 0.0
    %638 = vmatpush1.xpose.msra.mxu0 0.0
    %639 = vmatprep.subr.mxu0 0.0
    %640 = vmatpush1.xpose.msra.mxu0 0.0
    %641 = vmatprep.subr.mxu0 0.0
    %642 = vmatpush1.xpose.msra.mxu0 0.0
    %643 = vmatprep.subr.mxu0 0.0
    %644 = vmatpush1.xpose.msra.mxu0 0.0
    %645 = vmatprep.subr.mxu0 0.0
    %646 = vmatpush1.xpose.msra.mxu0 0.0
    %647 = vmatprep.subr.mxu0 0.0
    %648 = vmatpush1.xpose.msra.mxu0 0.0
    %649 = vmatprep.subr.mxu0 0.0
    %650 = vmatpush1.xpose.msra.mxu0 0.0
    %651 = vmatprep.subr.mxu0 0.0
    %652 = vmatpush1.xpose.msra.mxu0 0.0
    %653 = vmatprep.subr.mxu0 0.0
    %654 = vmatpush1.xpose.msra.mxu0 0.0
    %655 = vmatprep.subr.mxu0 0.0
    %656 = vmatpush1.xpose.msra.mxu0 0.0
    %657 = vmatprep.subr.mxu0 0.0
    %658 = vmatpush1.xpose.msra.mxu0 0.0
    %659 = vmatprep.subr.mxu0 0.0
    %660 = vmatpush1.xpose.msra.mxu0 0.0
    %661 = vmatprep.mubr.f32.mxu0 0.0
    %662 = vmatmul.mubr.f32.gmra.mrb[0].mxu0 %v593
    %v663 = vpop.f32.mrb[0].mxu0
    %v664 = vadd.f32 0.0, %v663
    %v665 = vpop.f32.mrb[0].mxu0
    %666 = vdwg.mxu0
    %v667 = vsel %vm327, -1e+20, %v586
    %v668 = vsel %vm328, -1e+20, %v664
    %v669 = vmax.f32 %v667, -1000000.0
    %v670 = vmax.f32 %v668, -1000000.0
    %v671 = vmin.f32 %v669, 1000000.0
    %v672 = vmin.f32 %v670, 1000000.0
    %v673 = vmul.f32 %v671, 0.17677669
    %v674 = vmul.f32 %v672, 0.17677669
    %v675 = vsel %vm165, %v673, -inf
    %676 = vmax.xlane.f32.xlu0 %v675
    %v677 = vpop.xlane.xlu0 %676
    %v678 = vsel %vm165, %v674, -inf
    %679 = vmax.xlane.f32.xlu0 %v678
    %v680 = vpop.xlane.xlu0 %679
    %v681 = vsub.f32 %v673, %v677
    %v682 = vsub.f32 %v674, %v680
    %v683 = vmul.f32 %v681, 1.442695
    %v684 = vpow.pop %v683
    %v685 = vmul.f32 %v682, 1.442695
    %v686 = vpow.pop %v685
    %v687 = vsel %vm165, %v684, 0.0
    %688 = vadd.xlane.f32.xlu0 %v687
    %v689 = vpop.xlane.xlu0 %688
    %v690 = vsel %vm165, %v686, 0.0
    %691 = vadd.xlane.f32.xlu0 %v690
    %v692 = vpop.xlane.xlu0 %691
    %v693 = vrcp.pop %v689
    %v694 = vmul.f32 %v684, %v693
    %v695 = vrcp.pop %v692
    %v696 = vmul.f32 %v686, %v695
    %697 = vrot.lane.b32.xlu0 %v150, 56
    %v698 = vpop.permute.xlu0 %697
    %v701 = vsel %vm165, %v694, 0
    %703 = vmatprep.subr.mxu0 0.0
    %704 = vmatpush1.msra.mxu0 %v698
    %705 = vmatprep.subr.mxu0 0.0
    %706 = vmatpush1.msra.mxu0 0.0
    %707 = vmatprep.subr.mxu0 0.0
    %708 = vmatpush1.msra.mxu0 0.0
    %709 = vmatprep.subr.mxu0 0.0
    %710 = vmatpush1.msra.mxu0 0.0
    %711 = vmatprep.subr.mxu0 0.0
    %712 = vmatpush1.msra.mxu0 0.0
    %713 = vmatprep.subr.mxu0 0.0
    %714 = vmatpush1.msra.mxu0 0.0
    %715 = vmatprep.subr.mxu0 0.0
    %716 = vmatpush1.msra.mxu0 0.0
    %717 = vmatprep.subr.mxu0 0.0
    %718 = vmatpush1.msra.mxu0 0.0
    %719 = vmatprep.subr.mxu0 0.0
    %720 = vmatpush1.msra.mxu0 0.0
    %721 = vmatprep.subr.mxu0 0.0
    %722 = vmatpush1.msra.mxu0 0.0
    %723 = vmatprep.subr.mxu0 0.0
    %724 = vmatpush1.msra.mxu0 0.0
    %725 = vmatprep.subr.mxu0 0.0
    %726 = vmatpush1.msra.mxu0 0.0
    %727 = vmatprep.subr.mxu0 0.0
    %728 = vmatpush1.msra.mxu0 0.0
    %729 = vmatprep.subr.mxu0 0.0
    %730 = vmatpush1.msra.mxu0 0.0
    %731 = vmatprep.subr.mxu0 0.0
    %732 = vmatpush1.msra.mxu0 0.0
    %733 = vmatprep.subr.mxu0 0.0
    %734 = vmatpush1.msra.mxu0 0.0
    %735 = vmatprep.subr.mxu0 0.0
    %736 = vmatpush1.msra.mxu0 0.0
    %737 = vmatprep.subr.mxu0 0.0
    %738 = vmatpush1.msra.mxu0 0.0
    %739 = vmatprep.subr.mxu0 0.0
    %740 = vmatpush1.msra.mxu0 0.0
    %741 = vmatprep.subr.mxu0 0.0
    %742 = vmatpush1.msra.mxu0 0.0
    %743 = vmatprep.subr.mxu0 0.0
    %744 = vmatpush1.msra.mxu0 0.0
    %745 = vmatprep.subr.mxu0 0.0
    %746 = vmatpush1.msra.mxu0 0.0
    %747 = vmatprep.subr.mxu0 0.0
    %748 = vmatpush1.msra.mxu0 0.0
    %749 = vmatprep.subr.mxu0 0.0
    %750 = vmatpush1.msra.mxu0 0.0
    %751 = vmatprep.subr.mxu0 0.0
    %752 = vmatpush1.msra.mxu0 0.0
    %753 = vmatprep.subr.mxu0 0.0
    %754 = vmatpush1.msra.mxu0 0.0
    %755 = vmatprep.subr.mxu0 0.0
    %756 = vmatpush1.msra.mxu0 0.0
    %757 = vmatprep.subr.mxu0 0.0
    %758 = vmatpush1.msra.mxu0 0.0
    %759 = vmatprep.subr.mxu0 0.0
    %760 = vmatpush1.msra.mxu0 0.0
    %761 = vmatprep.subr.mxu0 0.0
    %762 = vmatpush1.msra.mxu0 0.0
    %763 = vmatprep.subr.mxu0 0.0
    %764 = vmatpush1.msra.mxu0 0.0
    %765 = vmatprep.subr.mxu0 0.0
    %766 = vmatpush1.msra.mxu0 0.0
    %767 = vmatprep.mubr.f32.mxu0 0.0
    %768 = vmatmul.mubr.f32.gmra.mrb[0].mxu0 %v701
    %v769 = vpop.f32.mrb[0].mxu0
    %v770 = vadd.f32 0.0, %v769
    %v771 = vpop.f32.mrb[0].mxu0
    %772 = vdwg.mxu0
    %773 = vrot.lane.b32.xlu0 %v155, 56
    %v774 = vpop.permute.xlu0 %773
    %v777 = vsel %vm165, %v696, 0
    %779 = vmatprep.subr.mxu0 0.0
    %780 = vmatpush1.msra.mxu0 %v774
    %781 = vmatprep.subr.mxu0 0.0
    %782 = vmatpush1.msra.mxu0 0.0
    %783 = vmatprep.subr.mxu0 0.0
    %784 = vmatpush1.msra.mxu0 0.0
    %785 = vmatprep.subr.mxu0 0.0
    %786 = vmatpush1.msra.mxu0 0.0
    %787 = vmatprep.subr.mxu0 0.0
    %788 = vmatpush1.msra.mxu0 0.0
    %789 = vmatprep.subr.mxu0 0.0
    %790 = vmatpush1.msra.mxu0 0.0
    %791 = vmatprep.subr.mxu0 0.0
    %792 = vmatpush1.msra.mxu0 0.0
    %793 = vmatprep.subr.mxu0 0.0
    %794 = vmatpush1.msra.mxu0 0.0
    %795 = vmatprep.subr.mxu0 0.0
    %796 = vmatpush1.msra.mxu0 0.0
    %797 = vmatprep.subr.mxu0 0.0
    %798 = vmatpush1.msra.mxu0 0.0
    %799 = vmatprep.subr.mxu0 0.0
    %800 = vmatpush1.msra.mxu0 0.0
    %801 = vmatprep.subr.mxu0 0.0
    %802 = vmatpush1.msra.mxu0 0.0
    %803 = vmatprep.subr.mxu0 0.0
    %804 = vmatpush1.msra.mxu0 0.0
    %805 = vmatprep.subr.mxu0 0.0
    %806 = vmatpush1.msra.mxu0 0.0
    %807 = vmatprep.subr.mxu0 0.0
    %808 = vmatpush1.msra.mxu0 0.0
    %809 = vmatprep.subr.mxu0 0.0
    %810 = vmatpush1.msra.mxu0 0.0
    %811 = vmatprep.subr.mxu0 0.0
    %812 = vmatpush1.msra.mxu0 0.0
    %813 = vmatprep.subr.mxu0 0.0
    %814 = vmatpush1.msra.mxu0 0.0
    %815 = vmatprep.subr.mxu0 0.0
    %816 = vmatpush1.msra.mxu0 0.0
    %817 = vmatprep.subr.mxu0 0.0
    %818 = vmatpush1.msra.mxu0 0.0
    %819 = vmatprep.subr.mxu0 0.0
    %820 = vmatpush1.msra.mxu0 0.0
    %821 = vmatprep.subr.mxu0 0.0
    %822 = vmatpush1.msra.mxu0 0.0
    %823 = vmatprep.subr.mxu0 0.0
    %824 = vmatpush1.msra.mxu0 0.0
    %825 = vmatprep.subr.mxu0 0.0
    %826 = vmatpush1.msra.mxu0 0.0
    %827 = vmatprep.subr.mxu0 0.0
    %828 = vmatpush1.msra.mxu0 0.0
    %829 = vmatprep.subr.mxu0 0.0
    %830 = vmatpush1.msra.mxu0 0.0
    %831 = vmatprep.subr.mxu0 0.0
    %832 = vmatpush1.msra.mxu0 0.0
    %833 = vmatprep.subr.mxu0 0.0
    %834 = vmatpush1.msra.mxu0 0.0
    %835 = vmatprep.subr.mxu0 0.0
    %836 = vmatpush1.msra.mxu0 0.0
    %837 = vmatprep.subr.mxu0 0.0
    %838 = vmatpush1.msra.mxu0 0.0
    %839 = vmatprep.subr.mxu0 0.0
    %840 = vmatpush1.msra.mxu0 0.0
    %841 = vmatprep.subr.mxu0 0.0
    %842 = vmatpush1.msra.mxu0 0.0
    %843 = vmatprep.mubr.f32.mxu0 0.0
    %844 = vmatmul.mubr.f32.gmra.mrb[0].mxu0 %v777
    %v845 = vpop.f32.mrb[0].mxu0
    %v846 = vadd.f32 0.0, %v845
    %v847 = vpop.f32.mrb[0].mxu0
    %848 = vdwg.mxu0
    %849 = vrot.lane.b32.xlu0 %v150, 112
    %v850 = vpop.permute.xlu0 %849
    %851 = vrot.lane.b32.xlu0 %v150, 80
    %v852 = vpop.permute.xlu0 %851
    %v853 = vsel %vm165, %v850, 0
    %v855 = vsel %vm165, %v852, 0
    %857 = vmatprep.subr.mxu0 0.0
    %858 = vmatpush1.xpose.msra.mxu0 %v855
    %859 = vmatprep.subr.mxu0 0.0
    %860 = vmatpush1.xpose.msra.mxu0 0.0
    %861 = vmatprep.subr.mxu0 0.0
    %862 = vmatpush1.xpose.msra.mxu0 0.0
    %863 = vmatprep.subr.mxu0 0.0
    %864 = vmatpush1.xpose.msra.mxu0 0.0
    %865 = vmatprep.subr.mxu0 0.0
    %866 = vmatpush1.xpose.msra.mxu0 0.0
    %867 = vmatprep.subr.mxu0 0.0
    %868 = vmatpush1.xpose.msra.mxu0 0.0
    %869 = vmatprep.subr.mxu0 0.0
    %870 = vmatpush1.xpose.msra.mxu0 0.0
    %871 = vmatprep.subr.mxu0 0.0
    %872 = vmatpush1.xpose.msra.mxu0 0.0
    %873 = vmatprep.subr.mxu0 0.0
    %874 = vmatpush1.xpose.msra.mxu0 0.0
    %875 = vmatprep.subr.mxu0 0.0
    %876 = vmatpush1.xpose.msra.mxu0 0.0
    %877 = vmatprep.subr.mxu0 0.0
    %878 = vmatpush1.xpose.msra.mxu0 0.0
    %879 = vmatprep.subr.mxu0 0.0
    %880 = vmatpush1.xpose.msra.mxu0 0.0
    %881 = vmatprep.subr.mxu0 0.0
    %882 = vmatpush1.xpose.msra.mxu0 0.0
    %883 = vmatprep.subr.mxu0 0.0
    %884 = vmatpush1.xpose.msra.mxu0 0.0
    %885 = vmatprep.subr.mxu0 0.0
    %886 = vmatpush1.xpose.msra.mxu0 0.0
    %887 = vmatprep.subr.mxu0 0.0
    %888 = vmatpush1.xpose.msra.mxu0 0.0
    %889 = vmatprep.subr.mxu0 0.0
    %890 = vmatpush1.xpose.msra.mxu0 0.0
    %891 = vmatprep.subr.mxu0 0.0
    %892 = vmatpush1.xpose.msra.mxu0 0.0
    %893 = vmatprep.subr.mxu0 0.0
    %894 = vmatpush1.xpose.msra.mxu0 0.0
    %895 = vmatprep.subr.mxu0 0.0
    %896 = vmatpush1.xpose.msra.mxu0 0.0
    %897 = vmatprep.subr.mxu0 0.0
    %898 = vmatpush1.xpose.msra.mxu0 0.0
    %899 = vmatprep.subr.mxu0 0.0
    %900 = vmatpush1.xpose.msra.mxu0 0.0
    %901 = vmatprep.subr.mxu0 0.0
    %902 = vmatpush1.xpose.msra.mxu0 0.0
    %903 = vmatprep.subr.mxu0 0.0
    %904 = vmatpush1.xpose.msra.mxu0 0.0
    %905 = vmatprep.subr.mxu0 0.0
    %906 = vmatpush1.xpose.msra.mxu0 0.0
    %907 = vmatprep.subr.mxu0 0.0
    %908 = vmatpush1.xpose.msra.mxu0 0.0
    %909 = vmatprep.subr.mxu0 0.0
    %910 = vmatpush1.xpose.msra.mxu0 0.0
    %911 = vmatprep.subr.mxu0 0.0
    %912 = vmatpush1.xpose.msra.mxu0 0.0
    %913 = vmatprep.subr.mxu0 0.0
    %914 = vmatpush1.xpose.msra.mxu0 0.0
    %915 = vmatprep.subr.mxu0 0.0
    %916 = vmatpush1.xpose.msra.mxu0 0.0
    %917 = vmatprep.subr.mxu0 0.0
    %918 = vmatpush1.xpose.msra.mxu0 0.0
    %919 = vmatprep.subr.mxu0 0.0
    %920 = vmatpush1.xpose.msra.mxu0 0.0
    %921 = vmatprep.mubr.f32.mxu0 0.0
    %922 = vmatmul.mubr.f32.gmra.mrb[0].mxu0 %v853
    %v923 = vpop.f32.mrb[0].mxu0
    %v924 = vadd.f32 0.0, %v923
    %v925 = vpop.f32.mrb[0].mxu0
    %926 = vdwg.mxu0
    %927 = vrot.lane.b32.xlu0 %v155, 112
    %v928 = vpop.permute.xlu0 %927
    %929 = vrot.lane.b32.xlu0 %v155, 80
    %v930 = vpop.permute.xlu0 %929
    %v931 = vsel %vm165, %v928, 0
    %v933 = vsel %vm165, %v930, 0
    %935 = vmatprep.subr.mxu0 0.0
    %936 = vmatpush1.xpose.msra.mxu0 %v933
    %937 = vmatprep.subr.mxu0 0.0
    %938 = vmatpush1.xpose.msra.mxu0 0.0
    %939 = vmatprep.subr.mxu0 0.0
    %940 = vmatpush1.xpose.msra.mxu0 0.0
    %941 = vmatprep.subr.mxu0 0.0
    %942 = vmatpush1.xpose.msra.mxu0 0.0
    %943 = vmatprep.subr.mxu0 0.0
    %944 = vmatpush1.xpose.msra.mxu0 0.0
    %945 = vmatprep.subr.mxu0 0.0
    %946 = vmatpush1.xpose.msra.mxu0 0.0
    %947 = vmatprep.subr.mxu0 0.0
    %948 = vmatpush1.xpose.msra.mxu0 0.0
    %949 = vmatprep.subr.mxu0 0.0
    %950 = vmatpush1.xpose.msra.mxu0 0.0
    %951 = vmatprep.subr.mxu0 0.0
    %952 = vmatpush1.xpose.msra.mxu0 0.0
    %953 = vmatprep.subr.mxu0 0.0
    %954 = vmatpush1.xpose.msra.mxu0 0.0
    %955 = vmatprep.subr.mxu0 0.0
    %956 = vmatpush1.xpose.msra.mxu0 0.0
    %957 = vmatprep.subr.mxu0 0.0
    %958 = vmatpush1.xpose.msra.mxu0 0.0
    %959 = vmatprep.subr.mxu0 0.0
    %960 = vmatpush1.xpose.msra.mxu0 0.0
    %961 = vmatprep.subr.mxu0 0.0
    %962 = vmatpush1.xpose.msra.mxu0 0.0
    %963 = vmatprep.subr.mxu0 0.0
    %964 = vmatpush1.xpose.msra.mxu0 0.0
    %965 = vmatprep.subr.mxu0 0.0
    %966 = vmatpush1.xpose.msra.mxu0 0.0
    %967 = vmatprep.subr.mxu0 0.0
    %968 = vmatpush1.xpose.msra.mxu0 0.0
    %969 = vmatprep.subr.mxu0 0.0
    %970 = vmatpush1.xpose.msra.mxu0 0.0
    %971 = vmatprep.subr.mxu0 0.0
    %972 = vmatpush1.xpose.msra.mxu0 0.0
    %973 = vmatprep.subr.mxu0 0.0
    %974 = vmatpush1.xpose.msra.mxu0 0.0
    %975 = vmatprep.subr.mxu0 0.0
    %976 = vmatpush1.xpose.msra.mxu0 0.0
    %977 = vmatprep.subr.mxu0 0.0
    %978 = vmatpush1.xpose.msra.mxu0 0.0
    %979 = vmatprep.subr.mxu0 0.0
    %980 = vmatpush1.xpose.msra.mxu0 0.0
    %981 = vmatprep.subr.mxu0 0.0
    %982 = vmatpush1.xpose.msra.mxu0 0.0
    %983 = vmatprep.subr.mxu0 0.0
    %984 = vmatpush1.xpose.msra.mxu0 0.0
    %985 = vmatprep.subr.mxu0 0.0
    %986 = vmatpush1.xpose.msra.mxu0 0.0
    %987 = vmatprep.subr.mxu0 0.0
    %988 = vmatpush1.xpose.msra.mxu0 0.0
    %989 = vmatprep.subr.mxu0 0.0
    %990 = vmatpush1.xpose.msra.mxu0 0.0
    %991 = vmatprep.subr.mxu0 0.0
    %992 = vmatpush1.xpose.msra.mxu0 0.0
    %993 = vmatprep.subr.mxu0 0.0
    %994 = vmatpush1.xpose.msra.mxu0 0.0
    %995 = vmatprep.subr.mxu0 0.0
    %996 = vmatpush1.xpose.msra.mxu0 0.0
    %997 = vmatprep.subr.mxu0 0.0
    %998 = vmatpush1.xpose.msra.mxu0 0.0
    %999 = vmatprep.mubr.f32.mxu0 0.0
    %1000 = vmatmul.mubr.f32.gmra.mrb[0].mxu0 %v931
    %v1001 = vpop.f32.mrb[0].mxu0
    %v1002 = vadd.f32 0.0, %v1001
    %v1003 = vpop.f32.mrb[0].mxu0
    %1004 = vdwg.mxu0
    %v1005 = vsel %vm327, -1e+20, %v924
    %v1006 = vsel %vm328, -1e+20, %v1002
    %v1007 = vmax.f32 %v1005, -1000000.0
    %v1008 = vmax.f32 %v1006, -1000000.0
    %v1009 = vmin.f32 %v1007, 1000000.0
    %v1010 = vmin.f32 %v1008, 1000000.0
    %v1011 = vmul.f32 %v1009, 0.17677669
    %v1012 = vmul.f32 %v1010, 0.17677669
    %v1013 = vsel %vm165, %v1011, -inf
    %1014 = vmax.xlane.f32.xlu0 %v1013
    %v1015 = vpop.xlane.xlu0 %1014
    %v1016 = vsel %vm165, %v1012, -inf
    %1017 = vmax.xlane.f32.xlu0 %v1016
    %v1018 = vpop.xlane.xlu0 %1017
    %v1019 = vsub.f32 %v1011, %v1015
    %v1020 = vsub.f32 %v1012, %v1018
    %v1021 = vmul.f32 %v1019, 1.442695
    %v1022 = vpow.pop %v1021
    %v1023 = vmul.f32 %v1020, 1.442695
    %v1024 = vpow.pop %v1023
    %v1025 = vsel %vm165, %v1022, 0.0
    %1026 = vadd.xlane.f32.xlu0 %v1025
    %v1027 = vpop.xlane.xlu0 %1026
    %v1028 = vsel %vm165, %v1024, 0.0
    %1029 = vadd.xlane.f32.xlu0 %v1028
    %v1030 = vpop.xlane.xlu0 %1029
    %v1031 = vrcp.pop %v1027
    %v1032 = vmul.f32 %v1022, %v1031
    %v1033 = vrcp.pop %v1030
    %v1034 = vmul.f32 %v1024, %v1033
    %1035 = vrot.lane.b32.xlu0 %v150, 48
    %v1036 = vpop.permute.xlu0 %1035
    %v1039 = vsel %vm165, %v1032, 0
    %1041 = vmatprep.subr.mxu0 0.0
    %1042 = vmatpush1.msra.mxu0 %v1036
    %1043 = vmatprep.subr.mxu0 0.0
    %1044 = vmatpush1.msra.mxu0 0.0
    %1045 = vmatprep.subr.mxu0 0.0
    %1046 = vmatpush1.msra.mxu0 0.0
    %1047 = vmatprep.subr.mxu0 0.0
    %1048 = vmatpush1.msra.mxu0 0.0
    %1049 = vmatprep.subr.mxu0 0.0
    %1050 = vmatpush1.msra.mxu0 0.0
    %1051 = vmatprep.subr.mxu0 0.0
    %1052 = vmatpush1.msra.mxu0 0.0
    %1053 = vmatprep.subr.mxu0 0.0
    %1054 = vmatpush1.msra.mxu0 0.0
    %1055 = vmatprep.subr.mxu0 0.0
    %1056 = vmatpush1.msra.mxu0 0.0
    %1057 = vmatprep.subr.mxu0 0.0
    %1058 = vmatpush1.msra.mxu0 0.0
    %1059 = vmatprep.subr.mxu0 0.0
    %1060 = vmatpush1.msra.mxu0 0.0
    %1061 = vmatprep.subr.mxu0 0.0
    %1062 = vmatpush1.msra.mxu0 0.0
    %1063 = vmatprep.subr.mxu0 0.0
    %1064 = vmatpush1.msra.mxu0 0.0
    %1065 = vmatprep.subr.mxu0 0.0
    %1066 = vmatpush1.msra.mxu0 0.0
    %1067 = vmatprep.subr.mxu0 0.0
    %1068 = vmatpush1.msra.mxu0 0.0
    %1069 = vmatprep.subr.mxu0 0.0
    %1070 = vmatpush1.msra.mxu0 0.0
    %1071 = vmatprep.subr.mxu0 0.0
    %1072 = vmatpush1.msra.mxu0 0.0
    %1073 = vmatprep.subr.mxu0 0.0
    %1074 = vmatpush1.msra.mxu0 0.0
    %1075 = vmatprep.subr.mxu0 0.0
    %1076 = vmatpush1.msra.mxu0 0.0
    %1077 = vmatprep.subr.mxu0 0.0
    %1078 = vmatpush1.msra.mxu0 0.0
    %1079 = vmatprep.subr.mxu0 0.0
    %1080 = vmatpush1.msra.mxu0 0.0
    %1081 = vmatprep.subr.mxu0 0.0
    %1082 = vmatpush1.msra.mxu0 0.0
    %1083 = vmatprep.subr.mxu0 0.0
    %1084 = vmatpush1.msra.mxu0 0.0
    %1085 = vmatprep.subr.mxu0 0.0
    %1086 = vmatpush1.msra.mxu0 0.0
    %1087 = vmatprep.subr.mxu0 0.0
    %1088 = vmatpush1.msra.mxu0 0.0
    %1089 = vmatprep.subr.mxu0 0.0
    %1090 = vmatpush1.msra.mxu0 0.0
    %1091 = vmatprep.subr.mxu0 0.0
    %1092 = vmatpush1.msra.mxu0 0.0
    %1093 = vmatprep.subr.mxu0 0.0
    %1094 = vmatpush1.msra.mxu0 0.0
    %1095 = vmatprep.subr.mxu0 0.0
    %1096 = vmatpush1.msra.mxu0 0.0
    %1097 = vmatprep.subr.mxu0 0.0
    %1098 = vmatpush1.msra.mxu0 0.0
    %1099 = vmatprep.subr.mxu0 0.0
    %1100 = vmatpush1.msra.mxu0 0.0
    %1101 = vmatprep.subr.mxu0 0.0
    %1102 = vmatpush1.msra.mxu0 0.0
    %1103 = vmatprep.subr.mxu0 0.0
    %1104 = vmatpush1.msra.mxu0 0.0
    %1105 = vmatprep.mubr.f32.mxu0 0.0
    %1106 = vmatmul.mubr.f32.gmra.mrb[0].mxu0 %v1039
    %v1107 = vpop.f32.mrb[0].mxu0
    %v1108 = vadd.f32 0.0, %v1107
    %v1109 = vpop.f32.mrb[0].mxu0
    %1110 = vdwg.mxu0
    %1111 = vrot.lane.b32.xlu0 %v155, 48
    %v1112 = vpop.permute.xlu0 %1111
    %v1115 = vsel %vm165, %v1034, 0
    %1117 = vmatprep.subr.mxu0 0.0
    %1118 = vmatpush1.msra.mxu0 %v1112
    %1119 = vmatprep.subr.mxu0 0.0
    %1120 = vmatpush1.msra.mxu0 0.0
    %1121 = vmatprep.subr.mxu0 0.0
    %1122 = vmatpush1.msra.mxu0 0.0
    %1123 = vmatprep.subr.mxu0 0.0
    %1124 = vmatpush1.msra.mxu0 0.0
    %1125 = vmatprep.subr.mxu0 0.0
    %1126 = vmatpush1.msra.mxu0 0.0
    %1127 = vmatprep.subr.mxu0 0.0
    %1128 = vmatpush1.msra.mxu0 0.0
    %1129 = vmatprep.subr.mxu0 0.0
    %1130 = vmatpush1.msra.mxu0 0.0
    %1131 = vmatprep.subr.mxu0 0.0
    %1132 = vmatpush1.msra.mxu0 0.0
    %1133 = vmatprep.subr.mxu0 0.0
    %1134 = vmatpush1.msra.mxu0 0.0
    %1135 = vmatprep.subr.mxu0 0.0
    %1136 = vmatpush1.msra.mxu0 0.0
    %1137 = vmatprep.subr.mxu0 0.0
    %1138 = vmatpush1.msra.mxu0 0.0
    %1139 = vmatprep.subr.mxu0 0.0
    %1140 = vmatpush1.msra.mxu0 0.0
    %1141 = vmatprep.subr.mxu0 0.0
    %1142 = vmatpush1.msra.mxu0 0.0
    %1143 = vmatprep.subr.mxu0 0.0
    %1144 = vmatpush1.msra.mxu0 0.0
    %1145 = vmatprep.subr.mxu0 0.0
    %1146 = vmatpush1.msra.mxu0 0.0
    %1147 = vmatprep.subr.mxu0 0.0
    %1148 = vmatpush1.msra.mxu0 0.0
    %1149 = vmatprep.subr.mxu0 0.0
    %1150 = vmatpush1.msra.mxu0 0.0
    %1151 = vmatprep.subr.mxu0 0.0
    %1152 = vmatpush1.msra.mxu0 0.0
    %1153 = vmatprep.subr.mxu0 0.0
    %1154 = vmatpush1.msra.mxu0 0.0
    %1155 = vmatprep.subr.mxu0 0.0
    %1156 = vmatpush1.msra.mxu0 0.0
    %1157 = vmatprep.subr.mxu0 0.0
    %1158 = vmatpush1.msra.mxu0 0.0
    %1159 = vmatprep.subr.mxu0 0.0
    %1160 = vmatpush1.msra.mxu0 0.0
    %1161 = vmatprep.subr.mxu0 0.0
    %1162 = vmatpush1.msra.mxu0 0.0
    %1163 = vmatprep.subr.mxu0 0.0
    %1164 = vmatpush1.msra.mxu0 0.0
    %1165 = vmatprep.subr.mxu0 0.0
    %1166 = vmatpush1.msra.mxu0 0.0
    %1167 = vmatprep.subr.mxu0 0.0
    %1168 = vmatpush1.msra.mxu0 0.0
    %1169 = vmatprep.subr.mxu0 0.0
    %1170 = vmatpush1.msra.mxu0 0.0
    %1171 = vmatprep.subr.mxu0 0.0
    %1172 = vmatpush1.msra.mxu0 0.0
    %1173 = vmatprep.subr.mxu0 0.0
    %1174 = vmatpush1.msra.mxu0 0.0
    %1175 = vmatprep.subr.mxu0 0.0
    %1176 = vmatpush1.msra.mxu0 0.0
    %1177 = vmatprep.subr.mxu0 0.0
    %1178 = vmatpush1.msra.mxu0 0.0
    %1179 = vmatprep.subr.mxu0 0.0
    %1180 = vmatpush1.msra.mxu0 0.0
    %1181 = vmatprep.mubr.f32.mxu0 0.0
    %1182 = vmatmul.mubr.f32.gmra.mrb[0].mxu0 %v1115
    %v1183 = vpop.f32.mrb[0].mxu0
    %v1184 = vadd.f32 0.0, %v1183
    %v1185 = vpop.f32.mrb[0].mxu0
    %1186 = vdwg.mxu0
    %1187 = vrot.lane.b32.xlu0 %v150, 104
    %v1188 = vpop.permute.xlu0 %1187
    %1189 = vrot.lane.b32.xlu0 %v150, 72
    %v1190 = vpop.permute.xlu0 %1189
    %v1191 = vsel %vm165, %v1188, 0
    %v1193 = vsel %vm165, %v1190, 0
    %1195 = vmatprep.subr.mxu0 0.0
    %1196 = vmatpush1.xpose.msra.mxu0 %v1193
    %1197 = vmatprep.subr.mxu0 0.0
    %1198 = vmatpush1.xpose.msra.mxu0 0.0
    %1199 = vmatprep.subr.mxu0 0.0
    %1200 = vmatpush1.xpose.msra.mxu0 0.0
    %1201 = vmatprep.subr.mxu0 0.0
    %1202 = vmatpush1.xpose.msra.mxu0 0.0
    %1203 = vmatprep.subr.mxu0 0.0
    %1204 = vmatpush1.xpose.msra.mxu0 0.0
    %1205 = vmatprep.subr.mxu0 0.0
    %1206 = vmatpush1.xpose.msra.mxu0 0.0
    %1207 = vmatprep.subr.mxu0 0.0
    %1208 = vmatpush1.xpose.msra.mxu0 0.0
    %1209 = vmatprep.subr.mxu0 0.0
    %1210 = vmatpush1.xpose.msra.mxu0 0.0
    %1211 = vmatprep.subr.mxu0 0.0
    %1212 = vmatpush1.xpose.msra.mxu0 0.0
    %1213 = vmatprep.subr.mxu0 0.0
    %1214 = vmatpush1.xpose.msra.mxu0 0.0
    %1215 = vmatprep.subr.mxu0 0.0
    %1216 = vmatpush1.xpose.msra.mxu0 0.0
    %1217 = vmatprep.subr.mxu0 0.0
    %1218 = vmatpush1.xpose.msra.mxu0 0.0
    %1219 = vmatprep.subr.mxu0 0.0
    %1220 = vmatpush1.xpose.msra.mxu0 0.0
    %1221 = vmatprep.subr.mxu0 0.0
    %1222 = vmatpush1.xpose.msra.mxu0 0.0
    %1223 = vmatprep.subr.mxu0 0.0
    %1224 = vmatpush1.xpose.msra.mxu0 0.0
    %1225 = vmatprep.subr.mxu0 0.0
    %1226 = vmatpush1.xpose.msra.mxu0 0.0
    %1227 = vmatprep.subr.mxu0 0.0
    %1228 = vmatpush1.xpose.msra.mxu0 0.0
    %1229 = vmatprep.subr.mxu0 0.0
    %1230 = vmatpush1.xpose.msra.mxu0 0.0
    %1231 = vmatprep.subr.mxu0 0.0
    %1232 = vmatpush1.xpose.msra.mxu0 0.0
    %1233 = vmatprep.subr.mxu0 0.0
    %1234 = vmatpush1.xpose.msra.mxu0 0.0
    %1235 = vmatprep.subr.mxu0 0.0
    %1236 = vmatpush1.xpose.msra.mxu0 0.0
    %1237 = vmatprep.subr.mxu0 0.0
    %1238 = vmatpush1.xpose.msra.mxu0 0.0
    %1239 = vmatprep.subr.mxu0 0.0
    %1240 = vmatpush1.xpose.msra.mxu0 0.0
    %1241 = vmatprep.subr.mxu0 0.0
    %1242 = vmatpush1.xpose.msra.mxu0 0.0
    %1243 = vmatprep.subr.mxu0 0.0
    %1244 = vmatpush1.xpose.msra.mxu0 0.0
    %1245 = vmatprep.subr.mxu0 0.0
    %1246 = vmatpush1.xpose.msra.mxu0 0.0
    %1247 = vmatprep.subr.mxu0 0.0
    %1248 = vmatpush1.xpose.msra.mxu0 0.0
    %1249 = vmatprep.subr.mxu0 0.0
    %1250 = vmatpush1.xpose.msra.mxu0 0.0
    %1251 = vmatprep.subr.mxu0 0.0
    %1252 = vmatpush1.xpose.msra.mxu0 0.0
    %1253 = vmatprep.subr.mxu0 0.0
    %1254 = vmatpush1.xpose.msra.mxu0 0.0
    %1255 = vmatprep.subr.mxu0 0.0
    %1256 = vmatpush1.xpose.msra.mxu0 0.0
    %1257 = vmatprep.subr.mxu0 0.0
    %1258 = vmatpush1.xpose.msra.mxu0 0.0
    %1259 = vmatprep.mubr.f32.mxu0 0.0
    %1260 = vmatmul.mubr.f32.gmra.mrb[0].mxu0 %v1191
    %v1261 = vpop.f32.mrb[0].mxu0
    %v1262 = vadd.f32 0.0, %v1261
    %v1263 = vpop.f32.mrb[0].mxu0
    %1264 = vdwg.mxu0
    %1265 = vrot.lane.b32.xlu0 %v155, 104
    %v1266 = vpop.permute.xlu0 %1265
    %1267 = vrot.lane.b32.xlu0 %v155, 72
    %v1268 = vpop.permute.xlu0 %1267
    %v1269 = vsel %vm165, %v1266, 0
    %v1271 = vsel %vm165, %v1268, 0
    %1273 = vmatprep.subr.mxu0 0.0
    %1274 = vmatpush1.xpose.msra.mxu0 %v1271
    %1275 = vmatprep.subr.mxu0 0.0
    %1276 = vmatpush1.xpose.msra.mxu0 0.0
    %1277 = vmatprep.subr.mxu0 0.0
    %1278 = vmatpush1.xpose.msra.mxu0 0.0
    %1279 = vmatprep.subr.mxu0 0.0
    %1280 = vmatpush1.xpose.msra.mxu0 0.0
    %1281 = vmatprep.subr.mxu0 0.0
    %1282 = vmatpush1.xpose.msra.mxu0 0.0
    %1283 = vmatprep.subr.mxu0 0.0
    %1284 = vmatpush1.xpose.msra.mxu0 0.0
    %1285 = vmatprep.subr.mxu0 0.0
    %1286 = vmatpush1.xpose.msra.mxu0 0.0
    %1287 = vmatprep.subr.mxu0 0.0
    %1288 = vmatpush1.xpose.msra.mxu0 0.0
    %1289 = vmatprep.subr.mxu0 0.0
    %1290 = vmatpush1.xpose.msra.mxu0 0.0
    %1291 = vmatprep.subr.mxu0 0.0
    %1292 = vmatpush1.xpose.msra.mxu0 0.0
    %1293 = vmatprep.subr.mxu0 0.0
    %1294 = vmatpush1.xpose.msra.mxu0 0.0
    %1295 = vmatprep.subr.mxu0 0.0
    %1296 = vmatpush1.xpose.msra.mxu0 0.0
    %1297 = vmatprep.subr.mxu0 0.0
    %1298 = vmatpush1.xpose.msra.mxu0 0.0
    %1299 = vmatprep.subr.mxu0 0.0
    %1300 = vmatpush1.xpose.msra.mxu0 0.0
    %1301 = vmatprep.subr.mxu0 0.0
    %1302 = vmatpush1.xpose.msra.mxu0 0.0
    %1303 = vmatprep.subr.mxu0 0.0
    %1304 = vmatpush1.xpose.msra.mxu0 0.0
    %1305 = vmatprep.subr.mxu0 0.0
    %1306 = vmatpush1.xpose.msra.mxu0 0.0
    %1307 = vmatprep.subr.mxu0 0.0
    %1308 = vmatpush1.xpose.msra.mxu0 0.0
    %1309 = vmatprep.subr.mxu0 0.0
    %1310 = vmatpush1.xpose.msra.mxu0 0.0
    %1311 = vmatprep.subr.mxu0 0.0
    %1312 = vmatpush1.xpose.msra.mxu0 0.0
    %1313 = vmatprep.subr.mxu0 0.0
    %1314 = vmatpush1.xpose.msra.mxu0 0.0
    %1315 = vmatprep.subr.mxu0 0.0
    %1316 = vmatpush1.xpose.msra.mxu0 0.0
    %1317 = vmatprep.subr.mxu0 0.0
    %1318 = vmatpush1.xpose.msra.mxu0 0.0
    %1319 = vmatprep.subr.mxu0 0.0
    %1320 = vmatpush1.xpose.msra.mxu0 0.0
    %1321 = vmatprep.subr.mxu0 0.0
    %1322 = vmatpush1.xpose.msra.mxu0 0.0
    %1323 = vmatprep.subr.mxu0 0.0
    %1324 = vmatpush1.xpose.msra.mxu0 0.0
    %1325 = vmatprep.subr.mxu0 0.0
    %1326 = vmatpush1.xpose.msra.mxu0 0.0
    %1327 = vmatprep.subr.mxu0 0.0
    %1328 = vmatpush1.xpose.msra.mxu0 0.0
    %1329 = vmatprep.subr.mxu0 0.0
    %1330 = vmatpush1.xpose.msra.mxu0 0.0
    %1331 = vmatprep.subr.mxu0 0.0
    %1332 = vmatpush1.xpose.msra.mxu0 0.0
    %1333 = vmatprep.subr.mxu0 0.0
    %1334 = vmatpush1.xpose.msra.mxu0 0.0
    %1335 = vmatprep.subr.mxu0 0.0
    %1336 = vmatpush1.xpose.msra.mxu0 0.0
    %1337 = vmatprep.mubr.f32.mxu0 0.0
    %1338 = vmatmul.mubr.f32.gmra.mrb[0].mxu0 %v1269
    %v1339 = vpop.f32.mrb[0].mxu0
    %v1340 = vadd.f32 0.0, %v1339
    %v1341 = vpop.f32.mrb[0].mxu0
    %1342 = vdwg.mxu0
    %v1343 = vsel %vm327, -1e+20, %v1262
    %v1344 = vsel %vm328, -1e+20, %v1340
    %v1345 = vmax.f32 %v1343, -1000000.0
    %v1346 = vmax.f32 %v1344, -1000000.0
    %v1347 = vmin.f32 %v1345, 1000000.0
    %v1348 = vmin.f32 %v1346, 1000000.0
    %v1349 = vmul.f32 %v1347, 0.17677669
    %v1350 = vmul.f32 %v1348, 0.17677669
    %v1351 = vsel %vm165, %v1349, -inf
    %1352 = vmax.xlane.f32.xlu0 %v1351
    %v1353 = vpop.xlane.xlu0 %1352
    %v1354 = vsel %vm165, %v1350, -inf
    %1355 = vmax.xlane.f32.xlu0 %v1354
    %v1356 = vpop.xlane.xlu0 %1355
    %v1357 = vsub.f32 %v1349, %v1353
    %v1358 = vsub.f32 %v1350, %v1356
    %v1359 = vmul.f32 %v1357, 1.442695
    %v1360 = vpow.pop %v1359
    %v1361 = vmul.f32 %v1358, 1.442695
    %v1362 = vpow.pop %v1361
    %v1363 = vsel %vm165, %v1360, 0.0
    %1364 = vadd.xlane.f32.xlu0 %v1363
    %v1365 = vpop.xlane.xlu0 %1364
    %v1366 = vsel %vm165, %v1362, 0.0
    %1367 = vadd.xlane.f32.xlu0 %v1366
    %v1368 = vpop.xlane.xlu0 %1367
    %v1369 = vrcp.pop %v1365
    %v1370 = vmul.f32 %v1360, %v1369
    %v1371 = vrcp.pop %v1368
    %v1372 = vmul.f32 %v1362, %v1371
    %1373 = vrot.lane.b32.xlu0 %v150, 40
    %v1374 = vpop.permute.xlu0 %1373
    %v1377 = vsel %vm165, %v1370, 0
    %1379 = vmatprep.subr.mxu0 0.0
    %1380 = vmatpush1.msra.mxu0 %v1374
    %1381 = vmatprep.subr.mxu0 0.0
    %1382 = vmatpush1.msra.mxu0 0.0
    %1383 = vmatprep.subr.mxu0 0.0
    %1384 = vmatpush1.msra.mxu0 0.0
    %1385 = vmatprep.subr.mxu0 0.0
    %1386 = vmatpush1.msra.mxu0 0.0
    %1387 = vmatprep.subr.mxu0 0.0
    %1388 = vmatpush1.msra.mxu0 0.0
    %1389 = vmatprep.subr.mxu0 0.0
    %1390 = vmatpush1.msra.mxu0 0.0
    %1391 = vmatprep.subr.mxu0 0.0
    %1392 = vmatpush1.msra.mxu0 0.0
    %1393 = vmatprep.subr.mxu0 0.0
    %1394 = vmatpush1.msra.mxu0 0.0
    %1395 = vmatprep.subr.mxu0 0.0
    %1396 = vmatpush1.msra.mxu0 0.0
    %1397 = vmatprep.subr.mxu0 0.0
    %1398 = vmatpush1.msra.mxu0 0.0
    %1399 = vmatprep.subr.mxu0 0.0
    %1400 = vmatpush1.msra.mxu0 0.0
    %1401 = vmatprep.subr.mxu0 0.0
    %1402 = vmatpush1.msra.mxu0 0.0
    %1403 = vmatprep.subr.mxu0 0.0
    %1404 = vmatpush1.msra.mxu0 0.0
    %1405 = vmatprep.subr.mxu0 0.0
    %1406 = vmatpush1.msra.mxu0 0.0
    %1407 = vmatprep.subr.mxu0 0.0
    %1408 = vmatpush1.msra.mxu0 0.0
    %1409 = vmatprep.subr.mxu0 0.0
    %1410 = vmatpush1.msra.mxu0 0.0
    %1411 = vmatprep.subr.mxu0 0.0
    %1412 = vmatpush1.msra.mxu0 0.0
    %1413 = vmatprep.subr.mxu0 0.0
    %1414 = vmatpush1.msra.mxu0 0.0
    %1415 = vmatprep.subr.mxu0 0.0
    %1416 = vmatpush1.msra.mxu0 0.0
    %1417 = vmatprep.subr.mxu0 0.0
    %1418 = vmatpush1.msra.mxu0 0.0
    %1419 = vmatprep.subr.mxu0 0.0
    %1420 = vmatpush1.msra.mxu0 0.0
    %1421 = vmatprep.subr.mxu0 0.0
    %1422 = vmatpush1.msra.mxu0 0.0
    %1423 = vmatprep.subr.mxu0 0.0
    %1424 = vmatpush1.msra.mxu0 0.0
    %1425 = vmatprep.subr.mxu0 0.0
    %1426 = vmatpush1.msra.mxu0 0.0
    %1427 = vmatprep.subr.mxu0 0.0
    %1428 = vmatpush1.msra.mxu0 0.0
    %1429 = vmatprep.subr.mxu0 0.0
    %1430 = vmatpush1.msra.mxu0 0.0
    %1431 = vmatprep.subr.mxu0 0.0
    %1432 = vmatpush1.msra.mxu0 0.0
    %1433 = vmatprep.subr.mxu0 0.0
    %1434 = vmatpush1.msra.mxu0 0.0
    %1435 = vmatprep.subr.mxu0 0.0
    %1436 = vmatpush1.msra.mxu0 0.0
    %1437 = vmatprep.subr.mxu0 0.0
    %1438 = vmatpush1.msra.mxu0 0.0
    %1439 = vmatprep.subr.mxu0 0.0
    %1440 = vmatpush1.msra.mxu0 0.0
    %1441 = vmatprep.subr.mxu0 0.0
    %1442 = vmatpush1.msra.mxu0 0.0
    %1443 = vmatprep.mubr.f32.mxu0 0.0
    %1444 = vmatmul.mubr.f32.gmra.mrb[0].mxu0 %v1377
    %v1445 = vpop.f32.mrb[0].mxu0
    %v1446 = vadd.f32 0.0, %v1445
    %v1447 = vpop.f32.mrb[0].mxu0
    %1448 = vdwg.mxu0
    %1449 = vrot.lane.b32.xlu0 %v155, 40
    %v1450 = vpop.permute.xlu0 %1449
    %v1453 = vsel %vm165, %v1372, 0
    %1455 = vmatprep.subr.mxu0 0.0
    %1456 = vmatpush1.msra.mxu0 %v1450
    %1457 = vmatprep.subr.mxu0 0.0
    %1458 = vmatpush1.msra.mxu0 0.0
    %1459 = vmatprep.subr.mxu0 0.0
    %1460 = vmatpush1.msra.mxu0 0.0
    %1461 = vmatprep.subr.mxu0 0.0
    %1462 = vmatpush1.msra.mxu0 0.0
    %1463 = vmatprep.subr.mxu0 0.0
    %1464 = vmatpush1.msra.mxu0 0.0
    %1465 = vmatprep.subr.mxu0 0.0
    %1466 = vmatpush1.msra.mxu0 0.0
    %1467 = vmatprep.subr.mxu0 0.0
    %1468 = vmatpush1.msra.mxu0 0.0
    %1469 = vmatprep.subr.mxu0 0.0
    %1470 = vmatpush1.msra.mxu0 0.0
    %1471 = vmatprep.subr.mxu0 0.0
    %1472 = vmatpush1.msra.mxu0 0.0
    %1473 = vmatprep.subr.mxu0 0.0
    %1474 = vmatpush1.msra.mxu0 0.0
    %1475 = vmatprep.subr.mxu0 0.0
    %1476 = vmatpush1.msra.mxu0 0.0
    %1477 = vmatprep.subr.mxu0 0.0
    %1478 = vmatpush1.msra.mxu0 0.0
    %1479 = vmatprep.subr.mxu0 0.0
    %1480 = vmatpush1.msra.mxu0 0.0
    %1481 = vmatprep.subr.mxu0 0.0
    %1482 = vmatpush1.msra.mxu0 0.0
    %1483 = vmatprep.subr.mxu0 0.0
    %1484 = vmatpush1.msra.mxu0 0.0
    %1485 = vmatprep.subr.mxu0 0.0
    %1486 = vmatpush1.msra.mxu0 0.0
    %1487 = vmatprep.subr.mxu0 0.0
    %1488 = vmatpush1.msra.mxu0 0.0
    %1489 = vmatprep.subr.mxu0 0.0
    %1490 = vmatpush1.msra.mxu0 0.0
    %1491 = vmatprep.subr.mxu0 0.0
    %1492 = vmatpush1.msra.mxu0 0.0
    %1493 = vmatprep.subr.mxu0 0.0
    %1494 = vmatpush1.msra.mxu0 0.0
    %1495 = vmatprep.subr.mxu0 0.0
    %1496 = vmatpush1.msra.mxu0 0.0
    %1497 = vmatprep.subr.mxu0 0.0
    %1498 = vmatpush1.msra.mxu0 0.0
    %1499 = vmatprep.subr.mxu0 0.0
    %1500 = vmatpush1.msra.mxu0 0.0
    %1501 = vmatprep.subr.mxu0 0.0
    %1502 = vmatpush1.msra.mxu0 0.0
    %1503 = vmatprep.subr.mxu0 0.0
    %1504 = vmatpush1.msra.mxu0 0.0
    %1505 = vmatprep.subr.mxu0 0.0
    %1506 = vmatpush1.msra.mxu0 0.0
    %1507 = vmatprep.subr.mxu0 0.0
    %1508 = vmatpush1.msra.mxu0 0.0
    %1509 = vmatprep.subr.mxu0 0.0
    %1510 = vmatpush1.msra.mxu0 0.0
    %1511 = vmatprep.subr.mxu0 0.0
    %1512 = vmatpush1.msra.mxu0 0.0
    %1513 = vmatprep.subr.mxu0 0.0
    %1514 = vmatpush1.msra.mxu0 0.0
    %1515 = vmatprep.subr.mxu0 0.0
    %1516 = vmatpush1.msra.mxu0 0.0
    %1517 = vmatprep.subr.mxu0 0.0
    %1518 = vmatpush1.msra.mxu0 0.0
    %1519 = vmatprep.mubr.f32.mxu0 0.0
    %1520 = vmatmul.mubr.f32.gmra.mrb[0].mxu0 %v1453
    %v1521 = vpop.f32.mrb[0].mxu0
    %v1522 = vadd.f32 0.0, %v1521
    %v1523 = vpop.f32.mrb[0].mxu0
    %1524 = vdwg.mxu0
    %1527 = vrot.lane.b32.xlu0 %v770, 8
    %v1528 = vpop.permute.xlu0 %1527
    %1529 = vrot.lane.b32.xlu0 %v846, 8
    %v1530 = vpop.permute.xlu0 %1529
    %1535 = vrot.lane.b32.xlu0 %v1108, 16
    %v1536 = vpop.permute.xlu0 %1535
    %1537 = vrot.lane.b32.xlu0 %v1184, 16
    %v1538 = vpop.permute.xlu0 %1537
    %1543 = vrot.lane.b32.xlu0 %v1446, 24
    %v1544 = vpop.permute.xlu0 %1543
    %1545 = vrot.lane.b32.xlu0 %v1522, 24
    %v1546 = vpop.permute.xlu0 %1545
    %v1549 = vsel %vm165, %v432, %v1528
    %v1550 = vsel %vm165, %v508, %v1530
    %vm1551 = vcmask 130048
    %v1552 = vsel %vm1551, %v1549, %v1536
    %v1553 = vsel %vm1551, %v1550, %v1538
    %vm1554 = vcmask 195584
    %v1555 = vsel %vm1554, %v1552, %v1544
    %v1556 = vsel %vm1554, %v1553, %v1546
    %v1557 = vld [vmem:[#allocation7] sm:$0xff]
    %v1558 = vld [vmem:[#allocation7 + $0x8] sm:$0xff]
    %v1559 = vld [vmem:[#allocation7 + $0x10] sm:$0xff]
    %v1560 = vld [vmem:[#allocation7 + $0x18] sm:$0xff]
    %v1561 = vld [vmem:[%s4] sm:$0x1]
    %v1563 = vlaneseq
    %v1564 = vshrl.u32 %v1563, 7
    %v1565 = vsub.s32 0, %v1564
    %v1566 = vrot.slane %v1561, %v1565
    %vm1568 = vcmask 261120
    %v1570 = vsel %vm1568, %v1555, 0
    %v1573 = vsel %vm1568, %v1556, 0
    %1575 = vmatprep.subr.mxu0 0.0
    %1576 = vmatpush1.msra.mxu0 %v1557
    %1577 = vmatprep.subr.mxu0 0.0
    %1578 = vmatpush1.msra.mxu0 %v1558
    %1579 = vmatprep.subr.mxu0 0.0
    %1580 = vmatpush1.msra.mxu0 %v1559
    %1581 = vmatprep.subr.mxu0 0.0
    %1582 = vmatpush1.msra.mxu0 %v1560
    %1583 = vmatprep.subr.mxu0 0.0
    %1584 = vmatpush1.msra.mxu0 0.0
    %1585 = vmatprep.subr.mxu0 0.0
    %1586 = vmatpush1.msra.mxu0 0.0
    %1587 = vmatprep.subr.mxu0 0.0
    %1588 = vmatpush1.msra.mxu0 0.0
    %1589 = vmatprep.subr.mxu0 0.0
    %1590 = vmatpush1.msra.mxu0 0.0
    %1591 = vmatprep.subr.mxu0 0.0
    %1592 = vmatpush1.msra.mxu0 0.0
    %1593 = vmatprep.subr.mxu0 0.0
    %1594 = vmatpush1.msra.mxu0 0.0
    %1595 = vmatprep.subr.mxu0 0.0
    %1596 = vmatpush1.msra.mxu0 0.0
    %1597 = vmatprep.subr.mxu0 0.0
    %1598 = vmatpush1.msra.mxu0 0.0
    %1599 = vmatprep.subr.mxu0 0.0
    %1600 = vmatpush1.msra.mxu0 0.0
    %1601 = vmatprep.subr.mxu0 0.0
    %1602 = vmatpush1.msra.mxu0 0.0
    %1603 = vmatprep.subr.mxu0 0.0
    %1604 = vmatpush1.msra.mxu0 0.0
    %1605 = vmatprep.subr.mxu0 0.0
    %1606 = vmatpush1.msra.mxu0 0.0
    %1607 = vmatprep.subr.mxu0 0.0
    %1608 = vmatpush1.msra.mxu0 0.0
    %1609 = vmatprep.subr.mxu0 0.0
    %1610 = vmatpush1.msra.mxu0 0.0
    %1611 = vmatprep.subr.mxu0 0.0
    %1612 = vmatpush1.msra.mxu0 0.0
    %1613 = vmatprep.subr.mxu0 0.0
    %1614 = vmatpush1.msra.mxu0 0.0
    %1615 = vmatprep.subr.mxu0 0.0
    %1616 = vmatpush1.msra.mxu0 0.0
    %1617 = vmatprep.subr.mxu0 0.0
    %1618 = vmatpush1.msra.mxu0 0.0
    %1619 = vmatprep.subr.mxu0 0.0
    %1620 = vmatpush1.msra.mxu0 0.0
    %1621 = vmatprep.subr.mxu0 0.0
    %1622 = vmatpush1.msra.mxu0 0.0
    %1623 = vmatprep.subr.mxu0 0.0
    %1624 = vmatpush1.msra.mxu0 0.0
    %1625 = vmatprep.subr.mxu0 0.0
    %1626 = vmatpush1.msra.mxu0 0.0
    %1627 = vmatprep.subr.mxu0 0.0
    %1628 = vmatpush1.msra.mxu0 0.0
    %1629 = vmatprep.subr.mxu0 0.0
    %1630 = vmatpush1.msra.mxu0 0.0
    %1631 = vmatprep.subr.mxu0 0.0
    %1632 = vmatpush1.msra.mxu0 0.0
    %1633 = vmatprep.subr.mxu0 0.0
    %1634 = vmatpush1.msra.mxu0 0.0
    %1635 = vmatprep.subr.mxu0 0.0
    %1636 = vmatpush1.msra.mxu0 0.0
    %1637 = vmatprep.subr.mxu0 0.0
    %1638 = vmatpush1.msra.mxu0 0.0
    %1639 = vmatprep.mubr.f32.mxu0 0.0
    %1640 = vmatmul.mubr.f32.gmra.mrb[0].mxu0 %v1570
    %v1641 = vpop.f32.mrb[0].mxu0
    %v1642 = vadd.f32 %v1566, %v1641
    %v1643 = vpop.f32.mrb[0].mxu0
    %1644 = vmatprep.mubr.f32.mxu0 0.0
    %1645 = vmatmul.mubr.f32.gmra.mrb[0].mxu0 %v1573
    %v1646 = vpop.f32.mrb[0].mxu0
    %v1647 = vadd.f32 %v1566, %v1646
    %v1648 = vpop.f32.mrb[0].mxu0
    %1649 = vdwg.mxu0
    %1650 = vst.msk [vmem:[#allocation8] sm:$0xff] %vm1568, %v1642
    %1651 = vst.msk [vmem:[#allocation8 + $0x8] sm:$0xff] %vm1568, %v1647
    // Predicated region
    $region34: #{tpu_custom_call.1} parent=1 // pred_check
      _
    $region35: #{tpu_custom_call.1} parent=1 // pred_check_branch
      %1653 = sbr.rel (0) target = $region37
    $region36: #{tpu_custom_call.1} parent=1 // pred_region
      %s1655 = ssub.s32 256, 256
      %1656 = vsyncadd [#allocation4], %s1655
      %s1657 = sshll.u32 [#allocation8], 4
      %s1658 = int_to_ptr.vmem [resolvable:$true] %s1657
      %1663 = dma.vmem_to_hbm [thread:$0]  %s1658, 256, %s5, [#allocation4], 128, 128, 8
    $region37: #{tpu_custom_call.1} parent=1 // pred_fallthru
      _
    // Predicated region
    $region38: #{tpu_custom_call.1} parent=1 // pred_check
      _
    $region39: #{tpu_custom_call.1} parent=1 // pred_check_branch
      %1665 = sbr.rel (0) target = $region41
    $region40: #{tpu_custom_call.1} parent=1 // pred_region
      %1666 = dma.done [#allocation4], 256
    $region41: #{tpu_custom_call.1} parent=1 // pred_fallthru
      _
    %1667 = vsyncpa [#allocation3], 1
    %1668 = vsyncpa [#allocation6], 1
    %1669 = vsyncpa [#allocation4], 1

</llo_original>
